<compile_context>
chip_gen: v7x
topology: tpu7x:2x2x1
jax: 0.10.0
libtpu: 0.0.40
codegen_flags: <defaults>
</compile_context>

<pallas_src>
import functools

import jax
import jax.numpy as jnp
from jax.experimental import pallas as pl
from jax.experimental.pallas import tpu as pltpu


NUM_LAYERS = 12
LANE = 128
TB_GRAN = 16          # batch-tile granularity, safe for f32 and bf16 blocks


def _round_up(x, m):
    return (x + m - 1) // m * m


def _cdiv(a, b):
    return -(-a // b)


def _layer_dims(word_dim, hid_size, enc_size, num_cate):
    return [
        (2 * word_dim, hid_size),   # WeC2H
        (hid_size, word_dim),       # WeH2P
        (word_dim, hid_size),       # WeP2H
        (hid_size, hid_size),       # WeH2H
        (hid_size, enc_size),       # WeH2E
        (enc_size, num_cate),       # WeE2C
        (num_cate, enc_size),       # WdC2E
        (enc_size, hid_size),       # WdE2H
        (hid_size, hid_size),       # WdH2H
        (hid_size, word_dim),       # WdH2P
        (word_dim, hid_size),       # WdP2H
        (hid_size, 2 * word_dim),   # WdH2C
    ]


def _padded_layer_dims(word_dim, hid_size, enc_size, num_cate):
    return tuple((_round_up(i, LANE), _round_up(o, LANE))
                 for i, o in _layer_dims(word_dim, hid_size, enc_size, num_cate))


# ---------------------------------------------------------------- kernel ----
def rae_kernel(children_ref, w_ref, b_ref, out_ref, *,
               dims_pad, num_cate, act_dtype):
    """One batch tile of the full encoder+decoder chain.

    children_ref : [TB, Cp]        bf16  (zero-padded lanes)
    w_ref        : [12, P, P]      bf16  (pre-transposed to [in, out], zero pad)
    b_ref        : [12, 1, P]      f32   (zero-padded)
    out_ref      : [4, TB, OUT_P]  f32   (parent / encode / decode / scores)
    """
    out_p = out_ref.shape[-1]

    def lin(x, i, out_dtype):
        # Per-layer static padded dims: only the [kp, np_] sub-tile of the
        # stacked weight participates, so padding never inflates MXU work.
        kp, np_ = dims_pad[i]
        y = jnp.dot(x[:, :kp].astype(jnp.bfloat16), w_ref[i, :kp, :np_],
                    preferred_element_type=jnp.float32)
        y = y + b_ref[i, :, :np_]
        return jnp.tanh(y.astype(out_dtype))

    x = children_ref[...]                        # [TB, Cp] bf16

    # ---- encoder ----
    h = lin(x, 0, act_dtype)                     # WeC2H
    parent = lin(h, 1, jnp.float32)              # WeH2P   (kernel output)
    h = lin(parent, 2, act_dtype)                # WeP2H
    h = lin(h, 3, act_dtype)                     # WeH2H
    h = lin(h, 4, act_dtype)                     # WeH2E
    encode = lin(h, 5, jnp.float32)              # WeE2C   (kernel output)

    # ---- log-softmax over first `num_cate` lanes (padded lanes masked) ----
    lane = jax.lax.broadcasted_iota(jnp.int32, encode.shape, 1)
    valid = lane < num_cate
    masked = jnp.where(valid, encode, jnp.float32(-1e30))
    m = jnp.max(masked, axis=-1, keepdims=True)
    z = encode - m
    ez = jnp.where(valid, jnp.exp(z), jnp.float32(0.0))
    lse = jnp.log(jnp.sum(ez, axis=-1, keepdims=True))
    scores = jnp.where(valid, z - lse, jnp.float32(0.0))

    # ---- decoder ----
    d = lin(encode, 6, act_dtype)                # WdC2E
    d = lin(d, 7, act_dtype)                     # WdE2H
    d = lin(d, 8, act_dtype)                     # WdH2H
    d = lin(d, 9, act_dtype)                     # WdH2P
    d = lin(d, 10, act_dtype)                    # WdP2H
    decode = lin(d, 11, jnp.float32)             # WdH2C   (kernel output)

    # ---- single stacked output slab (one writeback pipeline) ----
    np_parent = dims_pad[1][1]
    np_encode = dims_pad[5][1]
    np_decode = dims_pad[11][1]
    if not (np_parent == np_encode == np_decode == out_p):
        out_ref[...] = jnp.zeros_like(out_ref)   # deterministic padded lanes
    out_ref[0, :, :np_parent] = parent
    out_ref[1, :, :np_encode] = encode
    out_ref[2, :, :np_decode] = decode
    out_ref[3, :, :np_encode] = scores


# --------------------------------------------------------------- wrapper ----
def prepare_params(params, word_dim, hid_size, enc_size, num_cate):
    """Pad, transpose and stack the 12 Linear layers ONCE (outside hot path)."""
    dims = _layer_dims(word_dim, hid_size, enc_size, num_cate)
    P = _round_up(max(max(i, o) for i, o in dims), LANE)
    ws, bs = [], []
    for (w, b), (din, dout) in zip(params, dims):
        # NOTE: padded weight rows/cols and bias lanes MUST stay exactly zero;
        # the kernel relies on padded activation lanes remaining exactly 0.
        wp = jnp.zeros((P, P), jnp.float32).at[:din, :dout].set(w.T)
        bp = jnp.zeros((1, P), jnp.float32).at[0, :dout].set(b)
        ws.append(wp)
        bs.append(bp)
    w_stack = jnp.stack(ws).astype(jnp.bfloat16)   # [12, P, P] bf16
    b_stack = jnp.stack(bs)                        # [12, 1, P] f32
    return w_stack, b_stack, P


def _choose_batch_tile(batch, tb_max):
    """Largest tile <= tb_max, split into >= 2 tiles whenever the batch allows
    (so v7x's two TensorCores both get work) and sized so the last tile is not
    mostly padded rows."""
    if batch <= TB_GRAN:
        return _round_up(max(batch, 1), TB_GRAN)
    n_tiles = max(2, _cdiv(batch, tb_max))
    return _round_up(_cdiv(batch, n_tiles), TB_GRAN)


@functools.partial(
    jax.jit,
    static_argnames=("word_dim", "hid_size", "enc_size", "num_cate",
                     "tb_max", "act_bf16"))
def rae_forward(children, w_stack, b_stack, *,
                word_dim, hid_size, enc_size, num_cate,
                tb_max=1024, act_bf16=True):
    B = children.shape[0]
    dims_pad = _padded_layer_dims(word_dim, hid_size, enc_size, num_cate)
    P = w_stack.shape[-1]
    C_PAD = dims_pad[0][0]                                  # padded 2*word_dim
    OUT_P = max(dims_pad[1][1], dims_pad[5][1], dims_pad[11][1])

    TB = _choose_batch_tile(B, tb_max)
    B_pad = _round_up(B, TB)
    num_tiles = B_pad // TB

    # Zero-pad children to [B_pad, C_PAD] bf16 once (padded lanes exactly 0).
    x = jnp.zeros((B_pad, C_PAD), jnp.bfloat16).at[:B, :2 * word_dim].set(
        children.astype(jnp.bfloat16))

    act_dtype = jnp.bfloat16 if act_bf16 else jnp.float32
    kernel = functools.partial(rae_kernel, dims_pad=dims_pad,
                               num_cate=num_cate, act_dtype=act_dtype)

    # VMEM footprint: resident single-copy weights + double-buffered I/O tiles
    # + intermediate headroom. Clamp to [32 MiB default, 48 MiB] so the limit
    # never drops below the compiler default and always fits physical VMEM.
    weight_bytes = NUM_LAYERS * P * P * 2 + NUM_LAYERS * P * 4
    io_bytes = 2 * (TB * C_PAD * 2) + 2 * (4 * TB * OUT_P * 4)
    scratch_bytes = 8 * TB * P * 4
    vmem_limit = min(48 << 20,
                     max(32 << 20,
                         weight_bytes + io_bytes + scratch_bytes + (4 << 20)))

    flops = 2 * B_pad * sum(k * n for k, n in dims_pad)
    transcendentals = B_pad * (sum(n for _, n in dims_pad) + dims_pad[5][1])
    bytes_accessed = (x.size * 2 + w_stack.size * 2 + b_stack.size * 4
                      + 4 * B_pad * OUT_P * 4)
    cost = pl.CostEstimate(flops=flops, transcendentals=transcendentals,
                           bytes_accessed=bytes_accessed)

    # Whole weight/bias stacks live in VMEM once (no blocking, no double buf).
    resident = pl.BlockSpec(memory_space=pltpu.MemorySpace.VMEM)
    batch_tile = pl.BlockSpec((TB, C_PAD), lambda i: (i, 0))

    out = pl.pallas_call(
        kernel,
        out_shape=jax.ShapeDtypeStruct((4, B_pad, OUT_P), jnp.float32),
        grid=(num_tiles,),
        in_specs=[
            batch_tile,   # children tile (bf16, lane-dense)
            resident,     # stacked pre-transposed weights [12, P, P] bf16
            resident,     # stacked biases [12, 1, P] f32
        ],
        out_specs=pl.BlockSpec((4, TB, OUT_P), lambda i: (0, i, 0)),
        compiler_params=pltpu.CompilerParams(
            dimension_semantics=("parallel",),
            vmem_limit_bytes=vmem_limit),
        cost_estimate=cost,
    )(x, w_stack, b_stack)

    # Slice padded slabs back to logical shapes (outside the kernel).
    parent = out[0, :B, :word_dim]
    encode = out[1, :B, :num_cate]
    decode = out[2, :B, :2 * word_dim]
    scores = out[3, :B, :num_cate]
    return parent, encode, decode, scores


# ----------------------------------------------------------------- setup ----
def make_linear_params(key, in_dim, out_dim):
    """PyTorch nn.Linear default init: U(-1/sqrt(fan_in), 1/sqrt(fan_in))."""
    kw, kb = jax.random.split(key)
    bound = 1.0 / jnp.sqrt(jnp.float32(in_dim))
    w = jax.random.uniform(kw, (out_dim, in_dim), jnp.float32, -bound, bound)
    b = jax.random.uniform(kb, (out_dim,), jnp.float32, -bound, bound)
    return w, b


def init_rae_params(key, word_dim, hid_size, enc_size, num_cate):
    dims = _layer_dims(word_dim, hid_size, enc_size, num_cate)
    keys = jax.random.split(key, len(dims))
    return [make_linear_params(k, i, o) for k, (i, o) in zip(keys, dims)]


# ------------------------------------------------------------- references ---
def _chain(lin, children):
    h = lin(children, 0, False)
    parent = lin(h, 1, True)
    h = lin(parent, 2, False)
    h = lin(h, 3, False)
    h = lin(h, 4, False)
    encode = lin(h, 5, True)
    scores = jax.nn.log_softmax(encode, axis=-1)
    d = lin(encode, 6, False)
    d = lin(d, 7, False)
    d = lin(d, 8, False)
    d = lin(d, 9, False)
    d = lin(d, 10, False)
    decode = lin(d, 11, True)
    return parent, encode, decode, scores


def rae_reference_f32(children, params):
    """Pure-f32 PyTorch-semantics reference."""
    def lin(x, i, is_out):
        w, b = params[i]
        return jnp.tanh(x @ w.T + b)
    return _chain(lin, children)


def rae_reference_emulated(children, params, act_bf16):
    """Mirrors the kernel precision path: bf16 matmul operands / f32 MXU
    accumulation, bf16 internal tanh on v6e/v7x, f32 tanh for output layers."""
    act_dtype = jnp.bfloat16 if act_bf16 else jnp.float32
    def lin(x, i, is_out):
        w, b = params[i]
        y = jnp.dot(x.astype(jnp.bfloat16), w.T.astype(jnp.bfloat16),
                    preferred_element_type=jnp.float32) + b
        return jnp.tanh(y.astype(jnp.float32 if is_out else act_dtype))
    return _chain(lin, children)


# ------------------------------------------------------------------ main ----
if __name__ == "__main__":
    word_dim, hid_size, enc_size, num_cate = 8, 32, 16, 4
    batch = 2

    key = jax.random.PRNGKey(0)
    k_params, k_input = jax.random.split(key)
    params = init_rae_params(k_params, word_dim, hid_size, enc_size, num_cate)
    children = jax.random.normal(k_input, (batch, 2 * word_dim), jnp.float32)

    w_stack, b_stack, _ = prepare_params(
        params, word_dim, hid_size, enc_size, num_cate)

    # Generation-aware knobs: bf16 tanh / activation carry only where the
    # VPU/EUP have bf16 paths (v6e/v7x); lower batch-tile cap on v5e and older.
    try:
        kind = jax.devices()[0].device_kind.lower()
    except Exception:
        kind = ""
    legacy = any(v in kind for v in ("v2", "v3", "v4", "v5"))
    act_bf16 = not legacy
    tb_max = 512 if legacy else 1024

    outs = rae_forward(
        children, w_stack, b_stack,
        word_dim=word_dim, hid_size=hid_size, enc_size=enc_size,
        num_cate=num_cate, tb_max=tb_max, act_bf16=act_bf16)
    outs = jax.block_until_ready(outs)

    # Tight check vs. a reference mirroring the kernel's precision path.
    refs_emu = rae_reference_emulated(children, params, act_bf16)
    tight_tol = 2e-2 if act_bf16 else 1e-3
    for o, r in zip(outs, refs_emu):
        assert o.shape == r.shape
        assert float(jnp.max(jnp.abs(o - r))) < tight_tol, \
            "mismatch vs emulated-precision reference"

    # Loose check vs. the pure-f32 PyTorch-semantics reference.
    refs_f32 = rae_reference_f32(children, params)
    for o, r in zip(outs, refs_f32):
        assert float(jnp.max(jnp.abs(o - r))) < 5e-2, "mismatch vs f32 reference"

    print("KERNEL_OK")
</pallas_src>

<mosaic_0001>
module attributes {stable_mosaic.version = 11 : i64} {
  func.func @rae_kernel(%arg0: i32, %arg1: memref<16x128xbf16, #tpu.memory_space<vmem>>, %arg2: memref<12x128x128xbf16, #tpu.memory_space<vmem>>, %arg3: memref<12x1x128xf32, #tpu.memory_space<vmem>>, %arg4: memref<4x16x128xf32, #tpu.memory_space<vmem>>) attributes {dimension_semantics = [#tpu.dimension_semantics<parallel>], iteration_bounds = array<i64: 1>, scalar_prefetch = 0 : i64, scratch_operands = 0 : i64, tpu.core_type = #tpu.core_type<tc>, window_params = [{transform_indices = @transform_0, window_bounds = array<i64: 16, 128>}, {pipeline_mode = #tpu.pipeline_mode<synchronous>, transform_indices = @transform_1, window_bounds = array<i64: 12, 128, 128>}, {pipeline_mode = #tpu.pipeline_mode<synchronous>, transform_indices = @transform_2, window_bounds = array<i64: 12, 1, 128>}, {transform_indices = @transform_3, window_bounds = array<i64: 4, 16, 128>}]} {
    %c0 = arith.constant 0 : index
    %c0_0 = arith.constant 0 : index
    %0 = vector.load %arg1[%c0, %c0_0] : memref<16x128xbf16, #tpu.memory_space<vmem>>, vector<16x128xbf16>
    %c0_1 = arith.constant 0 : index
    %c0_2 = arith.constant 0 : index
    %c0_3 = arith.constant 0 : index
    %1 = vector.load %arg2[%c0_1, %c0_2, %c0_3] : memref<12x128x128xbf16, #tpu.memory_space<vmem>>, vector<1x128x128xbf16>
    %2 = vector.shape_cast %1 : vector<1x128x128xbf16> to vector<128x128xbf16>
    %cst = arith.constant dense<0.000000e+00> : vector<16x128xf32>
    %3 = tpu.matmul %0, %2, %cst {dimension_numbers = #tpu.dot_dimension_numbers<[1], [0], [0], [1], [0, 0, 1, 1], [], []>} : vector<16x128xbf16>, vector<128x128xbf16>, vector<16x128xf32> -> vector<16x128xf32>
    %c0_4 = arith.constant 0 : index
    %c0_5 = arith.constant 0 : index
    %c0_6 = arith.constant 0 : index
    %4 = vector.load %arg3[%c0_4, %c0_5, %c0_6] : memref<12x1x128xf32, #tpu.memory_space<vmem>>, vector<1x1x128xf32>
    %5 = vector.shape_cast %4 : vector<1x1x128xf32> to vector<1x128xf32>
    %6 = vector.broadcast %5 : vector<1x128xf32> to vector<16x128xf32>
    %7 = arith.addf %3, %6 : vector<16x128xf32>
    %8 = arith.truncf %7 : vector<16x128xf32> to vector<16x128xbf16>
    %9 = math.tanh %8 : vector<16x128xbf16>
    %c1 = arith.constant 1 : index
    %c0_7 = arith.constant 0 : index
    %c0_8 = arith.constant 0 : index
    %10 = vector.load %arg2[%c1, %c0_7, %c0_8] : memref<12x128x128xbf16, #tpu.memory_space<vmem>>, vector<1x128x128xbf16>
    %11 = vector.shape_cast %10 : vector<1x128x128xbf16> to vector<128x128xbf16>
    %cst_9 = arith.constant dense<0.000000e+00> : vector<16x128xf32>
    %12 = tpu.matmul %9, %11, %cst_9 {dimension_numbers = #tpu.dot_dimension_numbers<[1], [0], [0], [1], [0, 0, 1, 1], [], []>} : vector<16x128xbf16>, vector<128x128xbf16>, vector<16x128xf32> -> vector<16x128xf32>
    %c1_10 = arith.constant 1 : index
    %c0_11 = arith.constant 0 : index
    %c0_12 = arith.constant 0 : index
    %13 = vector.load %arg3[%c1_10, %c0_11, %c0_12] : memref<12x1x128xf32, #tpu.memory_space<vmem>>, vector<1x1x128xf32>
    %14 = vector.shape_cast %13 : vector<1x1x128xf32> to vector<1x128xf32>
    %15 = vector.broadcast %14 : vector<1x128xf32> to vector<16x128xf32>
    %16 = arith.addf %12, %15 : vector<16x128xf32>
    %17 = math.tanh %16 : vector<16x128xf32>
    %18 = arith.truncf %17 : vector<16x128xf32> to vector<16x128xbf16>
    %c2 = arith.constant 2 : index
    %c0_13 = arith.constant 0 : index
    %c0_14 = arith.constant 0 : index
    %19 = vector.load %arg2[%c2, %c0_13, %c0_14] : memref<12x128x128xbf16, #tpu.memory_space<vmem>>, vector<1x128x128xbf16>
    %20 = vector.shape_cast %19 : vector<1x128x128xbf16> to vector<128x128xbf16>
    %cst_15 = arith.constant dense<0.000000e+00> : vector<16x128xf32>
    %21 = tpu.matmul %18, %20, %cst_15 {dimension_numbers = #tpu.dot_dimension_numbers<[1], [0], [0], [1], [0, 0, 1, 1], [], []>} : vector<16x128xbf16>, vector<128x128xbf16>, vector<16x128xf32> -> vector<16x128xf32>
    %c2_16 = arith.constant 2 : index
    %c0_17 = arith.constant 0 : index
    %c0_18 = arith.constant 0 : index
    %22 = vector.load %arg3[%c2_16, %c0_17, %c0_18] : memref<12x1x128xf32, #tpu.memory_space<vmem>>, vector<1x1x128xf32>
    %23 = vector.shape_cast %22 : vector<1x1x128xf32> to vector<1x128xf32>
    %24 = vector.broadcast %23 : vector<1x128xf32> to vector<16x128xf32>
    %25 = arith.addf %21, %24 : vector<16x128xf32>
    %26 = arith.truncf %25 : vector<16x128xf32> to vector<16x128xbf16>
    %27 = math.tanh %26 : vector<16x128xbf16>
    %c3 = arith.constant 3 : index
    %c0_19 = arith.constant 0 : index
    %c0_20 = arith.constant 0 : index
    %28 = vector.load %arg2[%c3, %c0_19, %c0_20] : memref<12x128x128xbf16, #tpu.memory_space<vmem>>, vector<1x128x128xbf16>
    %29 = vector.shape_cast %28 : vector<1x128x128xbf16> to vector<128x128xbf16>
    %cst_21 = arith.constant dense<0.000000e+00> : vector<16x128xf32>
    %30 = tpu.matmul %27, %29, %cst_21 {dimension_numbers = #tpu.dot_dimension_numbers<[1], [0], [0], [1], [0, 0, 1, 1], [], []>} : vector<16x128xbf16>, vector<128x128xbf16>, vector<16x128xf32> -> vector<16x128xf32>
    %c3_22 = arith.constant 3 : index
    %c0_23 = arith.constant 0 : index
    %c0_24 = arith.constant 0 : index
    %31 = vector.load %arg3[%c3_22, %c0_23, %c0_24] : memref<12x1x128xf32, #tpu.memory_space<vmem>>, vector<1x1x128xf32>
    %32 = vector.shape_cast %31 : vector<1x1x128xf32> to vector<1x128xf32>
    %33 = vector.broadcast %32 : vector<1x128xf32> to vector<16x128xf32>
    %34 = arith.addf %30, %33 : vector<16x128xf32>
    %35 = arith.truncf %34 : vector<16x128xf32> to vector<16x128xbf16>
    %36 = math.tanh %35 : vector<16x128xbf16>
    %c4 = arith.constant 4 : index
    %c0_25 = arith.constant 0 : index
    %c0_26 = arith.constant 0 : index
    %37 = vector.load %arg2[%c4, %c0_25, %c0_26] : memref<12x128x128xbf16, #tpu.memory_space<vmem>>, vector<1x128x128xbf16>
    %38 = vector.shape_cast %37 : vector<1x128x128xbf16> to vector<128x128xbf16>
    %cst_27 = arith.constant dense<0.000000e+00> : vector<16x128xf32>
    %39 = tpu.matmul %36, %38, %cst_27 {dimension_numbers = #tpu.dot_dimension_numbers<[1], [0], [0], [1], [0, 0, 1, 1], [], []>} : vector<16x128xbf16>, vector<128x128xbf16>, vector<16x128xf32> -> vector<16x128xf32>
    %c4_28 = arith.constant 4 : index
    %c0_29 = arith.constant 0 : index
    %c0_30 = arith.constant 0 : index
    %40 = vector.load %arg3[%c4_28, %c0_29, %c0_30] : memref<12x1x128xf32, #tpu.memory_space<vmem>>, vector<1x1x128xf32>
    %41 = vector.shape_cast %40 : vector<1x1x128xf32> to vector<1x128xf32>
    %42 = vector.broadcast %41 : vector<1x128xf32> to vector<16x128xf32>
    %43 = arith.addf %39, %42 : vector<16x128xf32>
    %44 = arith.truncf %43 : vector<16x128xf32> to vector<16x128xbf16>
    %45 = math.tanh %44 : vector<16x128xbf16>
    %c5 = arith.constant 5 : index
    %c0_31 = arith.constant 0 : index
    %c0_32 = arith.constant 0 : index
    %46 = vector.load %arg2[%c5, %c0_31, %c0_32] : memref<12x128x128xbf16, #tpu.memory_space<vmem>>, vector<1x128x128xbf16>
    %47 = vector.shape_cast %46 : vector<1x128x128xbf16> to vector<128x128xbf16>
    %cst_33 = arith.constant dense<0.000000e+00> : vector<16x128xf32>
    %48 = tpu.matmul %45, %47, %cst_33 {dimension_numbers = #tpu.dot_dimension_numbers<[1], [0], [0], [1], [0, 0, 1, 1], [], []>} : vector<16x128xbf16>, vector<128x128xbf16>, vector<16x128xf32> -> vector<16x128xf32>
    %c5_34 = arith.constant 5 : index
    %c0_35 = arith.constant 0 : index
    %c0_36 = arith.constant 0 : index
    %49 = vector.load %arg3[%c5_34, %c0_35, %c0_36] : memref<12x1x128xf32, #tpu.memory_space<vmem>>, vector<1x1x128xf32>
    %50 = vector.shape_cast %49 : vector<1x1x128xf32> to vector<1x128xf32>
    %51 = vector.broadcast %50 : vector<1x128xf32> to vector<16x128xf32>
    %52 = arith.addf %48, %51 : vector<16x128xf32>
    %53 = math.tanh %52 : vector<16x128xf32>
    %54 = tpu.iota {dimensions = array<i32: 1>} : vector<16x128xi32>
    %c4_i32 = arith.constant 4 : i32
    %55 = vector.broadcast %c4_i32 : i32 to vector<16x128xi32>
    %56 = arith.cmpi slt, %54, %55 : vector<16x128xi32>
    %cst_37 = arith.constant -1.000000e+30 : f32
    %57 = vector.broadcast %cst_37 : f32 to vector<16x128xf32>
    %58 = arith.select %56, %53, %57 : vector<16x128xi1>, vector<16x128xf32>
    %cst_38 = arith.constant dense<0xFF800000> : vector<16xf32>
    %59 = vector.multi_reduction <maximumf>, %58, %cst_38 [1] : vector<16x128xf32> to vector<16xf32>
    %60 = vector.shape_cast %59 : vector<16xf32> to vector<16x1xf32>
    %61 = vector.broadcast %60 : vector<16x1xf32> to vector<16x128xf32>
    %62 = arith.subf %53, %61 : vector<16x128xf32>
    %63 = math.exp %62 : vector<16x128xf32>
    %cst_39 = arith.constant 0.000000e+00 : f32
    %64 = vector.broadcast %cst_39 : f32 to vector<16x128xf32>
    %65 = arith.select %56, %63, %64 : vector<16x128xi1>, vector<16x128xf32>
    %cst_40 = arith.constant dense<0.000000e+00> : vector<16xf32>
    %66 = vector.multi_reduction <add>, %65, %cst_40 [1] : vector<16x128xf32> to vector<16xf32>
    %67 = vector.shape_cast %66 : vector<16xf32> to vector<16x1xf32>
    %68 = math.log %67 : vector<16x1xf32>
    %69 = vector.broadcast %68 : vector<16x1xf32> to vector<16x128xf32>
    %70 = arith.subf %62, %69 : vector<16x128xf32>
    %cst_41 = arith.constant 0.000000e+00 : f32
    %71 = vector.broadcast %cst_41 : f32 to vector<16x128xf32>
    %72 = arith.select %56, %70, %71 : vector<16x128xi1>, vector<16x128xf32>
    %73 = arith.truncf %53 : vector<16x128xf32> to vector<16x128xbf16>
    %c6 = arith.constant 6 : index
    %c0_42 = arith.constant 0 : index
    %c0_43 = arith.constant 0 : index
    %74 = vector.load %arg2[%c6, %c0_42, %c0_43] : memref<12x128x128xbf16, #tpu.memory_space<vmem>>, vector<1x128x128xbf16>
    %75 = vector.shape_cast %74 : vector<1x128x128xbf16> to vector<128x128xbf16>
    %cst_44 = arith.constant dense<0.000000e+00> : vector<16x128xf32>
    %76 = tpu.matmul %73, %75, %cst_44 {dimension_numbers = #tpu.dot_dimension_numbers<[1], [0], [0], [1], [0, 0, 1, 1], [], []>} : vector<16x128xbf16>, vector<128x128xbf16>, vector<16x128xf32> -> vector<16x128xf32>
    %c6_45 = arith.constant 6 : index
    %c0_46 = arith.constant 0 : index
    %c0_47 = arith.constant 0 : index
    %77 = vector.load %arg3[%c6_45, %c0_46, %c0_47] : memref<12x1x128xf32, #tpu.memory_space<vmem>>, vector<1x1x128xf32>
    %78 = vector.shape_cast %77 : vector<1x1x128xf32> to vector<1x128xf32>
    %79 = vector.broadcast %78 : vector<1x128xf32> to vector<16x128xf32>
    %80 = arith.addf %76, %79 : vector<16x128xf32>
    %81 = arith.truncf %80 : vector<16x128xf32> to vector<16x128xbf16>
    %82 = math.tanh %81 : vector<16x128xbf16>
    %c7 = arith.constant 7 : index
    %c0_48 = arith.constant 0 : index
    %c0_49 = arith.constant 0 : index
    %83 = vector.load %arg2[%c7, %c0_48, %c0_49] : memref<12x128x128xbf16, #tpu.memory_space<vmem>>, vector<1x128x128xbf16>
    %84 = vector.shape_cast %83 : vector<1x128x128xbf16> to vector<128x128xbf16>
    %cst_50 = arith.constant dense<0.000000e+00> : vector<16x128xf32>
    %85 = tpu.matmul %82, %84, %cst_50 {dimension_numbers = #tpu.dot_dimension_numbers<[1], [0], [0], [1], [0, 0, 1, 1], [], []>} : vector<16x128xbf16>, vector<128x128xbf16>, vector<16x128xf32> -> vector<16x128xf32>
    %c7_51 = arith.constant 7 : index
    %c0_52 = arith.constant 0 : index
    %c0_53 = arith.constant 0 : index
    %86 = vector.load %arg3[%c7_51, %c0_52, %c0_53] : memref<12x1x128xf32, #tpu.memory_space<vmem>>, vector<1x1x128xf32>
    %87 = vector.shape_cast %86 : vector<1x1x128xf32> to vector<1x128xf32>
    %88 = vector.broadcast %87 : vector<1x128xf32> to vector<16x128xf32>
    %89 = arith.addf %85, %88 : vector<16x128xf32>
    %90 = arith.truncf %89 : vector<16x128xf32> to vector<16x128xbf16>
    %91 = math.tanh %90 : vector<16x128xbf16>
    %c8 = arith.constant 8 : index
    %c0_54 = arith.constant 0 : index
    %c0_55 = arith.constant 0 : index
    %92 = vector.load %arg2[%c8, %c0_54, %c0_55] : memref<12x128x128xbf16, #tpu.memory_space<vmem>>, vector<1x128x128xbf16>
    %93 = vector.shape_cast %92 : vector<1x128x128xbf16> to vector<128x128xbf16>
    %cst_56 = arith.constant dense<0.000000e+00> : vector<16x128xf32>
    %94 = tpu.matmul %91, %93, %cst_56 {dimension_numbers = #tpu.dot_dimension_numbers<[1], [0], [0], [1], [0, 0, 1, 1], [], []>} : vector<16x128xbf16>, vector<128x128xbf16>, vector<16x128xf32> -> vector<16x128xf32>
    %c8_57 = arith.constant 8 : index
    %c0_58 = arith.constant 0 : index
    %c0_59 = arith.constant 0 : index
    %95 = vector.load %arg3[%c8_57, %c0_58, %c0_59] : memref<12x1x128xf32, #tpu.memory_space<vmem>>, vector<1x1x128xf32>
    %96 = vector.shape_cast %95 : vector<1x1x128xf32> to vector<1x128xf32>
    %97 = vector.broadcast %96 : vector<1x128xf32> to vector<16x128xf32>
    %98 = arith.addf %94, %97 : vector<16x128xf32>
    %99 = arith.truncf %98 : vector<16x128xf32> to vector<16x128xbf16>
    %100 = math.tanh %99 : vector<16x128xbf16>
    %c9 = arith.constant 9 : index
    %c0_60 = arith.constant 0 : index
    %c0_61 = arith.constant 0 : index
    %101 = vector.load %arg2[%c9, %c0_60, %c0_61] : memref<12x128x128xbf16, #tpu.memory_space<vmem>>, vector<1x128x128xbf16>
    %102 = vector.shape_cast %101 : vector<1x128x128xbf16> to vector<128x128xbf16>
    %cst_62 = arith.constant dense<0.000000e+00> : vector<16x128xf32>
    %103 = tpu.matmul %100, %102, %cst_62 {dimension_numbers = #tpu.dot_dimension_numbers<[1], [0], [0], [1], [0, 0, 1, 1], [], []>} : vector<16x128xbf16>, vector<128x128xbf16>, vector<16x128xf32> -> vector<16x128xf32>
    %c9_63 = arith.constant 9 : index
    %c0_64 = arith.constant 0 : index
    %c0_65 = arith.constant 0 : index
    %104 = vector.load %arg3[%c9_63, %c0_64, %c0_65] : memref<12x1x128xf32, #tpu.memory_space<vmem>>, vector<1x1x128xf32>
    %105 = vector.shape_cast %104 : vector<1x1x128xf32> to vector<1x128xf32>
    %106 = vector.broadcast %105 : vector<1x128xf32> to vector<16x128xf32>
    %107 = arith.addf %103, %106 : vector<16x128xf32>
    %108 = arith.truncf %107 : vector<16x128xf32> to vector<16x128xbf16>
    %109 = math.tanh %108 : vector<16x128xbf16>
    %c10 = arith.constant 10 : index
    %c0_66 = arith.constant 0 : index
    %c0_67 = arith.constant 0 : index
    %110 = vector.load %arg2[%c10, %c0_66, %c0_67] : memref<12x128x128xbf16, #tpu.memory_space<vmem>>, vector<1x128x128xbf16>
    %111 = vector.shape_cast %110 : vector<1x128x128xbf16> to vector<128x128xbf16>
    %cst_68 = arith.constant dense<0.000000e+00> : vector<16x128xf32>
    %112 = tpu.matmul %109, %111, %cst_68 {dimension_numbers = #tpu.dot_dimension_numbers<[1], [0], [0], [1], [0, 0, 1, 1], [], []>} : vector<16x128xbf16>, vector<128x128xbf16>, vector<16x128xf32> -> vector<16x128xf32>
    %c10_69 = arith.constant 10 : index
    %c0_70 = arith.constant 0 : index
    %c0_71 = arith.constant 0 : index
    %113 = vector.load %arg3[%c10_69, %c0_70, %c0_71] : memref<12x1x128xf32, #tpu.memory_space<vmem>>, vector<1x1x128xf32>
    %114 = vector.shape_cast %113 : vector<1x1x128xf32> to vector<1x128xf32>
    %115 = vector.broadcast %114 : vector<1x128xf32> to vector<16x128xf32>
    %116 = arith.addf %112, %115 : vector<16x128xf32>
    %117 = arith.truncf %116 : vector<16x128xf32> to vector<16x128xbf16>
    %118 = math.tanh %117 : vector<16x128xbf16>
    %c11 = arith.constant 11 : index
    %c0_72 = arith.constant 0 : index
    %c0_73 = arith.constant 0 : index
    %119 = vector.load %arg2[%c11, %c0_72, %c0_73] : memref<12x128x128xbf16, #tpu.memory_space<vmem>>, vector<1x128x128xbf16>
    %120 = vector.shape_cast %119 : vector<1x128x128xbf16> to vector<128x128xbf16>
    %cst_74 = arith.constant dense<0.000000e+00> : vector<16x128xf32>
    %121 = tpu.matmul %118, %120, %cst_74 {dimension_numbers = #tpu.dot_dimension_numbers<[1], [0], [0], [1], [0, 0, 1, 1], [], []>} : vector<16x128xbf16>, vector<128x128xbf16>, vector<16x128xf32> -> vector<16x128xf32>
    %c11_75 = arith.constant 11 : index
    %c0_76 = arith.constant 0 : index
    %c0_77 = arith.constant 0 : index
    %122 = vector.load %arg3[%c11_75, %c0_76, %c0_77] : memref<12x1x128xf32, #tpu.memory_space<vmem>>, vector<1x1x128xf32>
    %123 = vector.shape_cast %122 : vector<1x1x128xf32> to vector<1x128xf32>
    %124 = vector.broadcast %123 : vector<1x128xf32> to vector<16x128xf32>
    %125 = arith.addf %121, %124 : vector<16x128xf32>
    %126 = math.tanh %125 : vector<16x128xf32>
    %c0_78 = arith.constant 0 : index
    %c0_79 = arith.constant 0 : index
    %c0_80 = arith.constant 0 : index
    %127 = vector.load %arg4[%c0_78, %c0_79, %c0_80] : memref<4x16x128xf32, #tpu.memory_space<vmem>>, vector<1x16x128xf32>
    %128 = vector.shape_cast %127 : vector<1x16x128xf32> to vector<16x128xf32>
    %129 = vector.shape_cast %17 : vector<16x128xf32> to vector<1x16x128xf32>
    tpu.vector_store %arg4[%c0_78, %c0_79, %c0_80], %129 {strides = array<i32>} : memref<4x16x128xf32, #tpu.memory_space<vmem>>, vector<1x16x128xf32>,
    %c1_81 = arith.constant 1 : index
    %c0_82 = arith.constant 0 : index
    %c0_83 = arith.constant 0 : index
    %130 = vector.load %arg4[%c1_81, %c0_82, %c0_83] : memref<4x16x128xf32, #tpu.memory_space<vmem>>, vector<1x16x128xf32>
    %131 = vector.shape_cast %130 : vector<1x16x128xf32> to vector<16x128xf32>
    %132 = vector.shape_cast %53 : vector<16x128xf32> to vector<1x16x128xf32>
    tpu.vector_store %arg4[%c1_81, %c0_82, %c0_83], %132 {strides = array<i32>} : memref<4x16x128xf32, #tpu.memory_space<vmem>>, vector<1x16x128xf32>,
    %c2_84 = arith.constant 2 : index
    %c0_85 = arith.constant 0 : index
    %c0_86 = arith.constant 0 : index
    %133 = vector.load %arg4[%c2_84, %c0_85, %c0_86] : memref<4x16x128xf32, #tpu.memory_space<vmem>>, vector<1x16x128xf32>
    %134 = vector.shape_cast %133 : vector<1x16x128xf32> to vector<16x128xf32>
    %135 = vector.shape_cast %126 : vector<16x128xf32> to vector<1x16x128xf32>
    tpu.vector_store %arg4[%c2_84, %c0_85, %c0_86], %135 {strides = array<i32>} : memref<4x16x128xf32, #tpu.memory_space<vmem>>, vector<1x16x128xf32>,
    %c3_87 = arith.constant 3 : index
    %c0_88 = arith.constant 0 : index
    %c0_89 = arith.constant 0 : index
    %136 = vector.load %arg4[%c3_87, %c0_88, %c0_89] : memref<4x16x128xf32, #tpu.memory_space<vmem>>, vector<1x16x128xf32>
    %137 = vector.shape_cast %136 : vector<1x16x128xf32> to vector<16x128xf32>
    %138 = vector.shape_cast %72 : vector<16x128xf32> to vector<1x16x128xf32>
    tpu.vector_store %arg4[%c3_87, %c0_88, %c0_89], %138 {strides = array<i32>} : memref<4x16x128xf32, #tpu.memory_space<vmem>>, vector<1x16x128xf32>,
    return
  }
  func.func @transform_0(%arg0: i32) -> (i32, i32) {
    %c0_i32 = arith.constant 0 : i32
    %c0_i32_0 = arith.constant 0 : i32
    return %arg0, %c0_i32 : i32, i32
  }
  func.func @transform_1(%arg0: i32) -> (i32, i32, i32) {
    %c0_i32 = arith.constant 0 : i32
    %c0_i32_0 = arith.constant 0 : i32
    %c0_i32_1 = arith.constant 0 : i32
    %c0_i32_2 = arith.constant 0 : i32
    return %c0_i32, %c0_i32_0, %c0_i32_1 : i32, i32, i32
  }
  func.func @transform_2(%arg0: i32) -> (i32, i32, i32) {
    %c0_i32 = arith.constant 0 : i32
    %c0_i32_0 = arith.constant 0 : i32
    %c0_i32_1 = arith.constant 0 : i32
    %c0_i32_2 = arith.constant 0 : i32
    return %c0_i32, %c0_i32_0, %c0_i32_1 : i32, i32, i32
  }
  func.func @transform_3(%arg0: i32) -> (i32, i32, i32) {
    %c0_i32 = arith.constant 0 : i32
    %c0_i32_0 = arith.constant 0 : i32
    %c0_i32_1 = arith.constant 0 : i32
    return %c0_i32, %arg0, %c0_i32_0 : i32, i32, i32
  }
}

</mosaic_0001>

<llo_original>
// kernel: rae_forward.1
$region0: #{rae_forward.1}
  #allocation0 [shape = 'u32[]', space=smem, size = 0x4, offset = 0x4, fixed_abs, tag = 'smem constant byte address 0x4 - core index']
  #allocation1 [shape = 'u32[144,128]{1,0:T(1,128)}', space=vmem, size = 0x12000, scoped, tag = 'internal scratch']
  %s0 = inlined_call_operand.vmem [shape: bf16[16,128], index: 0, kind: input, shape index: {}]
  %s1 = inlined_call_operand.hbm [shape: bf16[12,128,128], index: 1, kind: input, shape index: {}]
  %s2 = inlined_call_operand.vmem [shape: f32[12,1,128], index: 2, kind: input, shape index: {}]
  %s3 = inlined_call_operand.vmem [shape: f32[4,16,128], index: 3, kind: output, shape index: {}]
  %s4 = sld [smem:[#allocation0]]
  $region26: #{rae_forward.1} parent=0
    _
  %s6 = ssub.s32 1, %s4
  %s7 = scalar_select 0, %s6, %s4
  $region1: #{rae_forward.1} parent=0
    #allocation2 [shape = 'u8[393216]{0}', space=vmem, size = 0x60000, scoped, tag = 'input window, operand 1, single buffered']
    #allocation3 [shape = 's32[1]{0}', space=sflag, size = 0x4, scoped, tag = 'scoped memory for rae_forward.1']
    %8 = vsyncpa [#allocation3], 0
    // Predicated region
    $region2: #{rae_forward.1} parent=1 // pred_check
      _
    $region3: #{rae_forward.1} parent=1 // pred_check_branch
      %10 = sbr.rel (0) target = $region5
    $region4: #{rae_forward.1} parent=1 // pred_region
      _
    $region5: #{rae_forward.1} parent=1 // pred_fallthru
      _
    // Predicated region
    $region6: #{rae_forward.1} parent=1 // pred_check
      _
    $region7: #{rae_forward.1} parent=1 // pred_check_branch
      %12 = sbr.rel (0) target = $region9
    $region8: #{rae_forward.1} parent=1 // pred_region
      %s14 = ssub.s32 12288, 12288
      %15 = vsyncadd [#allocation3], %s14
      %s16 = sshll.u32 [#allocation2], 4
      %s17 = int_to_ptr.vmem [resolvable:$true] %s16
      %22 = dma.hbm_to_vmem [thread:$0]  %s1, 12288, %s17, [#allocation3], 64, 64, 4
    $region9: #{rae_forward.1} parent=1 // pred_fallthru
      _
    // Predicated region
    $region10: #{rae_forward.1} parent=1 // pred_check
      _
    $region11: #{rae_forward.1} parent=1 // pred_check_branch
      %24 = sbr.rel (0) target = $region13
    $region12: #{rae_forward.1} parent=1 // pred_region
      _
    $region13: #{rae_forward.1} parent=1 // pred_fallthru
      _
    // Predicated region
    $region14: #{rae_forward.1} parent=1 // pred_check
      _
    $region15: #{rae_forward.1} parent=1 // pred_check_branch
      %26 = sbr.rel (0) target = $region17
    $region16: #{rae_forward.1} parent=1 // pred_region
      %27 = dma.done [#allocation3], 12288
    $region17: #{rae_forward.1} parent=1 // pred_fallthru
      _
    %v29 = vld [vmem:[%s0] sm:$0xf]
    %v30 = vld [vmem:[%s0 + $0x4] sm:$0xf]
    %v31 = vld [vmem:[#allocation2] sm:$0xf]
    %v32 = vld [vmem:[#allocation2 + $0x4] sm:$0xf]
    %v33 = vld [vmem:[#allocation2 + $0x8] sm:$0xf]
    %v34 = vld [vmem:[#allocation2 + $0xc] sm:$0xf]
    %v35 = vld [vmem:[#allocation2 + $0x10] sm:$0xf]
    %v36 = vld [vmem:[#allocation2 + $0x14] sm:$0xf]
    %v37 = vld [vmem:[#allocation2 + $0x18] sm:$0xf]
    %v38 = vld [vmem:[#allocation2 + $0x1c] sm:$0xf]
    %v39 = vld [vmem:[#allocation2 + $0x20] sm:$0xf]
    %v40 = vld [vmem:[#allocation2 + $0x24] sm:$0xf]
    %v41 = vld [vmem:[#allocation2 + $0x28] sm:$0xf]
    %v42 = vld [vmem:[#allocation2 + $0x2c] sm:$0xf]
    %v43 = vld [vmem:[#allocation2 + $0x30] sm:$0xf]
    %v44 = vld [vmem:[#allocation2 + $0x34] sm:$0xf]
    %v45 = vld [vmem:[#allocation2 + $0x38] sm:$0xf]
    %v46 = vld [vmem:[#allocation2 + $0x3c] sm:$0xf]
    %v47 = vld [vmem:[%s2] sm:$0x1]
    %v49 = vlaneseq
    %v50 = vshrl.u32 %v49, 7
    %v51 = vsub.s32 0, %v50
    %v52 = vrot.slane %v47, %v51
    %v56 = vunpack.c.l.b16 %v29
    %v57 = vunpack.c.l.b16 %v30
    %v58 = vpack.c.b16 %v57, %v56
    %v76 = vunpack.c.l.b16 %v31
    %v77 = vunpack.c.l.b16 %v32
    %v78 = vunpack.c.l.b16 %v33
    %v79 = vunpack.c.l.b16 %v34
    %v80 = vunpack.c.l.b16 %v35
    %v81 = vunpack.c.l.b16 %v36
    %v82 = vunpack.c.l.b16 %v37
    %v83 = vunpack.c.l.b16 %v38
    %v84 = vunpack.c.l.b16 %v39
    %v85 = vunpack.c.l.b16 %v40
    %v86 = vunpack.c.l.b16 %v41
    %v87 = vunpack.c.l.b16 %v42
    %v88 = vunpack.c.l.b16 %v43
    %v89 = vunpack.c.l.b16 %v44
    %v90 = vunpack.c.l.b16 %v45
    %v91 = vunpack.c.l.b16 %v46
    %v92 = vpack.c.b16 %v77, %v76
    %v93 = vpack.c.b16 %v79, %v78
    %v94 = vpack.c.b16 %v81, %v80
    %v95 = vpack.c.b16 %v83, %v82
    %v96 = vpack.c.b16 %v85, %v84
    %v97 = vpack.c.b16 %v87, %v86
    %v98 = vpack.c.b16 %v89, %v88
    %v99 = vpack.c.b16 %v91, %v90
    %108 = vmatprep.subr.bf16.mxu0 0
    %109 = vmatpush1.bf16.msra.mxu0 %v92
    %110 = vmatprep.subr.bf16.mxu0 0
    %111 = vmatpush1.bf16.msra.mxu0 %v93
    %112 = vmatprep.subr.bf16.mxu0 0
    %113 = vmatpush1.bf16.msra.mxu0 %v94
    %114 = vmatprep.subr.bf16.mxu0 0
    %115 = vmatpush1.bf16.msra.mxu0 %v95
    %116 = vmatprep.subr.bf16.mxu0 0
    %117 = vmatpush1.bf16.msra.mxu0 %v96
    %118 = vmatprep.subr.bf16.mxu0 0
    %119 = vmatpush1.bf16.msra.mxu0 %v97
    %120 = vmatprep.subr.bf16.mxu0 0
    %121 = vmatpush1.bf16.msra.mxu0 %v98
    %122 = vmatprep.subr.bf16.mxu0 0
    %123 = vmatpush1.bf16.msra.mxu0 %v99
    %124 = vmatprep.subr.bf16.mxu0 0
    %125 = vmatpush1.bf16.msra.mxu0 0
    %126 = vmatprep.subr.bf16.mxu0 0
    %127 = vmatpush1.bf16.msra.mxu0 0
    %128 = vmatprep.subr.bf16.mxu0 0
    %129 = vmatpush1.bf16.msra.mxu0 0
    %130 = vmatprep.subr.bf16.mxu0 0
    %131 = vmatpush1.bf16.msra.mxu0 0
    %132 = vmatprep.subr.bf16.mxu0 0
    %133 = vmatpush1.bf16.msra.mxu0 0
    %134 = vmatprep.subr.bf16.mxu0 0
    %135 = vmatpush1.bf16.msra.mxu0 0
    %136 = vmatprep.subr.bf16.mxu0 0
    %137 = vmatpush1.bf16.msra.mxu0 0
    %138 = vmatprep.subr.bf16.mxu0 0
    %139 = vmatpush1.bf16.msra.mxu0 0
    %140 = vmatprep.mubr.bf16.mxu0 0
    %141 = vmatmul.mubr.bf16.gmra.mrb[0].mxu0 %v58
    %v142 = vpop.f32.mrb[0].mxu0
    %v143 = vadd.f32 %v52, %v142
    %v144 = vpop.f32.mrb[0].mxu0
    %v145 = vpop.f32.mrb[0].mxu0
    %v146 = vadd.f32 %v52, %v145
    %v147 = vpop.f32.mrb[0].mxu0
    %148 = vdwg.mxu0
    %v149 = vpack.c.bf16 %v146, %v143
    %v150 = vtanh.bf16.pop %v149
    %s151 = scalar_lea.vmem [#allocation2], 64
    %v152 = vld [vmem:[%s151] sm:$0xf]
    %v153 = vld [vmem:[%s151 + $0x4] sm:$0xf]
    %v154 = vld [vmem:[%s151 + $0x8] sm:$0xf]
    %v155 = vld [vmem:[%s151 + $0xc] sm:$0xf]
    %v156 = vld [vmem:[%s151 + $0x10] sm:$0xf]
    %v157 = vld [vmem:[%s151 + $0x14] sm:$0xf]
    %v158 = vld [vmem:[%s151 + $0x18] sm:$0xf]
    %v159 = vld [vmem:[%s151 + $0x1c] sm:$0xf]
    %v160 = vld [vmem:[%s151 + $0x20] sm:$0xf]
    %v161 = vld [vmem:[%s151 + $0x24] sm:$0xf]
    %v162 = vld [vmem:[%s151 + $0x28] sm:$0xf]
    %v163 = vld [vmem:[%s151 + $0x2c] sm:$0xf]
    %v164 = vld [vmem:[%s151 + $0x30] sm:$0xf]
    %v165 = vld [vmem:[%s151 + $0x34] sm:$0xf]
    %v166 = vld [vmem:[%s151 + $0x38] sm:$0xf]
    %v167 = vld [vmem:[%s151 + $0x3c] sm:$0xf]
    %s168 = scalar_lea.vmem %s2, 1
    %v169 = vld [vmem:[%s168] sm:$0x1]
    %v171 = vlaneseq
    %v172 = vshrl.u32 %v171, 7
    %v173 = vsub.s32 0, %v172
    %v174 = vrot.slane %v169, %v173
    %v192 = vunpack.c.l.b16 %v152
    %v193 = vunpack.c.l.b16 %v153
    %v194 = vunpack.c.l.b16 %v154
    %v195 = vunpack.c.l.b16 %v155
    %v196 = vunpack.c.l.b16 %v156
    %v197 = vunpack.c.l.b16 %v157
    %v198 = vunpack.c.l.b16 %v158
    %v199 = vunpack.c.l.b16 %v159
    %v200 = vunpack.c.l.b16 %v160
    %v201 = vunpack.c.l.b16 %v161
    %v202 = vunpack.c.l.b16 %v162
    %v203 = vunpack.c.l.b16 %v163
    %v204 = vunpack.c.l.b16 %v164
    %v205 = vunpack.c.l.b16 %v165
    %v206 = vunpack.c.l.b16 %v166
    %v207 = vunpack.c.l.b16 %v167
    %v208 = vpack.c.b16 %v193, %v192
    %v209 = vpack.c.b16 %v195, %v194
    %v210 = vpack.c.b16 %v197, %v196
    %v211 = vpack.c.b16 %v199, %v198
    %v212 = vpack.c.b16 %v201, %v200
    %v213 = vpack.c.b16 %v203, %v202
    %v214 = vpack.c.b16 %v205, %v204
    %v215 = vpack.c.b16 %v207, %v206
    %224 = vmatprep.subr.bf16.mxu0 0
    %225 = vmatpush1.bf16.msra.mxu0 %v208
    %226 = vmatprep.subr.bf16.mxu0 0
    %227 = vmatpush1.bf16.msra.mxu0 %v209
    %228 = vmatprep.subr.bf16.mxu0 0
    %229 = vmatpush1.bf16.msra.mxu0 %v210
    %230 = vmatprep.subr.bf16.mxu0 0
    %231 = vmatpush1.bf16.msra.mxu0 %v211
    %232 = vmatprep.subr.bf16.mxu0 0
    %233 = vmatpush1.bf16.msra.mxu0 %v212
    %234 = vmatprep.subr.bf16.mxu0 0
    %235 = vmatpush1.bf16.msra.mxu0 %v213
    %236 = vmatprep.subr.bf16.mxu0 0
    %237 = vmatpush1.bf16.msra.mxu0 %v214
    %238 = vmatprep.subr.bf16.mxu0 0
    %239 = vmatpush1.bf16.msra.mxu0 %v215
    %240 = vmatprep.subr.bf16.mxu0 0
    %241 = vmatpush1.bf16.msra.mxu0 0
    %242 = vmatprep.subr.bf16.mxu0 0
    %243 = vmatpush1.bf16.msra.mxu0 0
    %244 = vmatprep.subr.bf16.mxu0 0
    %245 = vmatpush1.bf16.msra.mxu0 0
    %246 = vmatprep.subr.bf16.mxu0 0
    %247 = vmatpush1.bf16.msra.mxu0 0
    %248 = vmatprep.subr.bf16.mxu0 0
    %249 = vmatpush1.bf16.msra.mxu0 0
    %250 = vmatprep.subr.bf16.mxu0 0
    %251 = vmatpush1.bf16.msra.mxu0 0
    %252 = vmatprep.subr.bf16.mxu0 0
    %253 = vmatpush1.bf16.msra.mxu0 0
    %254 = vmatprep.subr.bf16.mxu0 0
    %255 = vmatpush1.bf16.msra.mxu0 0
    %256 = vmatprep.mubr.bf16.mxu0 0
    %257 = vmatmul.mubr.bf16.gmra.mrb[0].mxu0 %v150
    %v258 = vpop.f32.mrb[0].mxu0
    %v259 = vadd.f32 %v174, %v258
    %v260 = vpop.f32.mrb[0].mxu0
    %v261 = vpop.f32.mrb[0].mxu0
    %v262 = vadd.f32 %v174, %v261
    %v263 = vpop.f32.mrb[0].mxu0
    %264 = vdwg.mxu0
    %v265 = vtanh.pop %v259
    %v266 = vtanh.pop %v262
    %v267 = vpack.c.bf16 %v266, %v265
    %s268 = scalar_lea.vmem [#allocation2], 128
    %v269 = vld [vmem:[%s268] sm:$0xf]
    %v270 = vld [vmem:[%s268 + $0x4] sm:$0xf]
    %v271 = vld [vmem:[%s268 + $0x8] sm:$0xf]
    %v272 = vld [vmem:[%s268 + $0xc] sm:$0xf]
    %v273 = vld [vmem:[%s268 + $0x10] sm:$0xf]
    %v274 = vld [vmem:[%s268 + $0x14] sm:$0xf]
    %v275 = vld [vmem:[%s268 + $0x18] sm:$0xf]
    %v276 = vld [vmem:[%s268 + $0x1c] sm:$0xf]
    %v277 = vld [vmem:[%s268 + $0x20] sm:$0xf]
    %v278 = vld [vmem:[%s268 + $0x24] sm:$0xf]
    %v279 = vld [vmem:[%s268 + $0x28] sm:$0xf]
    %v280 = vld [vmem:[%s268 + $0x2c] sm:$0xf]
    %v281 = vld [vmem:[%s268 + $0x30] sm:$0xf]
    %v282 = vld [vmem:[%s268 + $0x34] sm:$0xf]
    %v283 = vld [vmem:[%s268 + $0x38] sm:$0xf]
    %v284 = vld [vmem:[%s268 + $0x3c] sm:$0xf]
    %s285 = scalar_lea.vmem %s2, 2
    %v286 = vld [vmem:[%s285] sm:$0x1]
    %v288 = vlaneseq
    %v289 = vshrl.u32 %v288, 7
    %v290 = vsub.s32 0, %v289
    %v291 = vrot.slane %v286, %v290
    %v309 = vunpack.c.l.b16 %v269
    %v310 = vunpack.c.l.b16 %v270
    %v311 = vunpack.c.l.b16 %v271
    %v312 = vunpack.c.l.b16 %v272
    %v313 = vunpack.c.l.b16 %v273
    %v314 = vunpack.c.l.b16 %v274
    %v315 = vunpack.c.l.b16 %v275
    %v316 = vunpack.c.l.b16 %v276
    %v317 = vunpack.c.l.b16 %v277
    %v318 = vunpack.c.l.b16 %v278
    %v319 = vunpack.c.l.b16 %v279
    %v320 = vunpack.c.l.b16 %v280
    %v321 = vunpack.c.l.b16 %v281
    %v322 = vunpack.c.l.b16 %v282
    %v323 = vunpack.c.l.b16 %v283
    %v324 = vunpack.c.l.b16 %v284
    %v325 = vpack.c.b16 %v310, %v309
    %v326 = vpack.c.b16 %v312, %v311
    %v327 = vpack.c.b16 %v314, %v313
    %v328 = vpack.c.b16 %v316, %v315
    %v329 = vpack.c.b16 %v318, %v317
    %v330 = vpack.c.b16 %v320, %v319
    %v331 = vpack.c.b16 %v322, %v321
    %v332 = vpack.c.b16 %v324, %v323
    %341 = vmatprep.subr.bf16.mxu0 0
    %342 = vmatpush1.bf16.msra.mxu0 %v325
    %343 = vmatprep.subr.bf16.mxu0 0
    %344 = vmatpush1.bf16.msra.mxu0 %v326
    %345 = vmatprep.subr.bf16.mxu0 0
    %346 = vmatpush1.bf16.msra.mxu0 %v327
    %347 = vmatprep.subr.bf16.mxu0 0
    %348 = vmatpush1.bf16.msra.mxu0 %v328
    %349 = vmatprep.subr.bf16.mxu0 0
    %350 = vmatpush1.bf16.msra.mxu0 %v329
    %351 = vmatprep.subr.bf16.mxu0 0
    %352 = vmatpush1.bf16.msra.mxu0 %v330
    %353 = vmatprep.subr.bf16.mxu0 0
    %354 = vmatpush1.bf16.msra.mxu0 %v331
    %355 = vmatprep.subr.bf16.mxu0 0
    %356 = vmatpush1.bf16.msra.mxu0 %v332
    %357 = vmatprep.subr.bf16.mxu0 0
    %358 = vmatpush1.bf16.msra.mxu0 0
    %359 = vmatprep.subr.bf16.mxu0 0
    %360 = vmatpush1.bf16.msra.mxu0 0
    %361 = vmatprep.subr.bf16.mxu0 0
    %362 = vmatpush1.bf16.msra.mxu0 0
    %363 = vmatprep.subr.bf16.mxu0 0
    %364 = vmatpush1.bf16.msra.mxu0 0
    %365 = vmatprep.subr.bf16.mxu0 0
    %366 = vmatpush1.bf16.msra.mxu0 0
    %367 = vmatprep.subr.bf16.mxu0 0
    %368 = vmatpush1.bf16.msra.mxu0 0
    %369 = vmatprep.subr.bf16.mxu0 0
    %370 = vmatpush1.bf16.msra.mxu0 0
    %371 = vmatprep.subr.bf16.mxu0 0
    %372 = vmatpush1.bf16.msra.mxu0 0
    %373 = vmatprep.mubr.bf16.mxu0 0
    %374 = vmatmul.mubr.bf16.gmra.mrb[0].mxu0 %v267
    %v375 = vpop.f32.mrb[0].mxu0
    %v376 = vadd.f32 %v291, %v375
    %v377 = vpop.f32.mrb[0].mxu0
    %v378 = vpop.f32.mrb[0].mxu0
    %v379 = vadd.f32 %v291, %v378
    %v380 = vpop.f32.mrb[0].mxu0
    %381 = vdwg.mxu0
    %v382 = vpack.c.bf16 %v379, %v376
    %v383 = vtanh.bf16.pop %v382
    %s384 = scalar_lea.vmem [#allocation2], 192
    %v385 = vld [vmem:[%s384] sm:$0xf]
    %v386 = vld [vmem:[%s384 + $0x4] sm:$0xf]
    %v387 = vld [vmem:[%s384 + $0x8] sm:$0xf]
    %v388 = vld [vmem:[%s384 + $0xc] sm:$0xf]
    %v389 = vld [vmem:[%s384 + $0x10] sm:$0xf]
    %v390 = vld [vmem:[%s384 + $0x14] sm:$0xf]
    %v391 = vld [vmem:[%s384 + $0x18] sm:$0xf]
    %v392 = vld [vmem:[%s384 + $0x1c] sm:$0xf]
    %v393 = vld [vmem:[%s384 + $0x20] sm:$0xf]
    %v394 = vld [vmem:[%s384 + $0x24] sm:$0xf]
    %v395 = vld [vmem:[%s384 + $0x28] sm:$0xf]
    %v396 = vld [vmem:[%s384 + $0x2c] sm:$0xf]
    %v397 = vld [vmem:[%s384 + $0x30] sm:$0xf]
    %v398 = vld [vmem:[%s384 + $0x34] sm:$0xf]
    %v399 = vld [vmem:[%s384 + $0x38] sm:$0xf]
    %v400 = vld [vmem:[%s384 + $0x3c] sm:$0xf]
    %s401 = scalar_lea.vmem %s2, 3
    %v402 = vld [vmem:[%s401] sm:$0x1]
    %v404 = vlaneseq
    %v405 = vshrl.u32 %v404, 7
    %v406 = vsub.s32 0, %v405
    %v407 = vrot.slane %v402, %v406
    %v425 = vunpack.c.l.b16 %v385
    %v426 = vunpack.c.l.b16 %v386
    %v427 = vunpack.c.l.b16 %v387
    %v428 = vunpack.c.l.b16 %v388
    %v429 = vunpack.c.l.b16 %v389
    %v430 = vunpack.c.l.b16 %v390
    %v431 = vunpack.c.l.b16 %v391
    %v432 = vunpack.c.l.b16 %v392
    %v433 = vunpack.c.l.b16 %v393
    %v434 = vunpack.c.l.b16 %v394
    %v435 = vunpack.c.l.b16 %v395
    %v436 = vunpack.c.l.b16 %v396
    %v437 = vunpack.c.l.b16 %v397
    %v438 = vunpack.c.l.b16 %v398
    %v439 = vunpack.c.l.b16 %v399
    %v440 = vunpack.c.l.b16 %v400
    %v441 = vpack.c.b16 %v426, %v425
    %v442 = vpack.c.b16 %v428, %v427
    %v443 = vpack.c.b16 %v430, %v429
    %v444 = vpack.c.b16 %v432, %v431
    %v445 = vpack.c.b16 %v434, %v433
    %v446 = vpack.c.b16 %v436, %v435
    %v447 = vpack.c.b16 %v438, %v437
    %v448 = vpack.c.b16 %v440, %v439
    %457 = vmatprep.subr.bf16.mxu0 0
    %458 = vmatpush1.bf16.msra.mxu0 %v441
    %459 = vmatprep.subr.bf16.mxu0 0
    %460 = vmatpush1.bf16.msra.mxu0 %v442
    %461 = vmatprep.subr.bf16.mxu0 0
    %462 = vmatpush1.bf16.msra.mxu0 %v443
    %463 = vmatprep.subr.bf16.mxu0 0
    %464 = vmatpush1.bf16.msra.mxu0 %v444
    %465 = vmatprep.subr.bf16.mxu0 0
    %466 = vmatpush1.bf16.msra.mxu0 %v445
    %467 = vmatprep.subr.bf16.mxu0 0
    %468 = vmatpush1.bf16.msra.mxu0 %v446
    %469 = vmatprep.subr.bf16.mxu0 0
    %470 = vmatpush1.bf16.msra.mxu0 %v447
    %471 = vmatprep.subr.bf16.mxu0 0
    %472 = vmatpush1.bf16.msra.mxu0 %v448
    %473 = vmatprep.subr.bf16.mxu0 0
    %474 = vmatpush1.bf16.msra.mxu0 0
    %475 = vmatprep.subr.bf16.mxu0 0
    %476 = vmatpush1.bf16.msra.mxu0 0
    %477 = vmatprep.subr.bf16.mxu0 0
    %478 = vmatpush1.bf16.msra.mxu0 0
    %479 = vmatprep.subr.bf16.mxu0 0
    %480 = vmatpush1.bf16.msra.mxu0 0
    %481 = vmatprep.subr.bf16.mxu0 0
    %482 = vmatpush1.bf16.msra.mxu0 0
    %483 = vmatprep.subr.bf16.mxu0 0
    %484 = vmatpush1.bf16.msra.mxu0 0
    %485 = vmatprep.subr.bf16.mxu0 0
    %486 = vmatpush1.bf16.msra.mxu0 0
    %487 = vmatprep.subr.bf16.mxu0 0
    %488 = vmatpush1.bf16.msra.mxu0 0
    %489 = vmatprep.mubr.bf16.mxu0 0
    %490 = vmatmul.mubr.bf16.gmra.mrb[0].mxu0 %v383
    %v491 = vpop.f32.mrb[0].mxu0
    %v492 = vadd.f32 %v407, %v491
    %v493 = vpop.f32.mrb[0].mxu0
    %v494 = vpop.f32.mrb[0].mxu0
    %v495 = vadd.f32 %v407, %v494
    %v496 = vpop.f32.mrb[0].mxu0
    %497 = vdwg.mxu0
    %v498 = vpack.c.bf16 %v495, %v492
    %v499 = vtanh.bf16.pop %v498
    %s500 = scalar_lea.vmem [#allocation2], 256
    %v501 = vld [vmem:[%s500] sm:$0xf]
    %v502 = vld [vmem:[%s500 + $0x4] sm:$0xf]
    %v503 = vld [vmem:[%s500 + $0x8] sm:$0xf]
    %v504 = vld [vmem:[%s500 + $0xc] sm:$0xf]
    %v505 = vld [vmem:[%s500 + $0x10] sm:$0xf]
    %v506 = vld [vmem:[%s500 + $0x14] sm:$0xf]
    %v507 = vld [vmem:[%s500 + $0x18] sm:$0xf]
    %v508 = vld [vmem:[%s500 + $0x1c] sm:$0xf]
    %v509 = vld [vmem:[%s500 + $0x20] sm:$0xf]
    %v510 = vld [vmem:[%s500 + $0x24] sm:$0xf]
    %v511 = vld [vmem:[%s500 + $0x28] sm:$0xf]
    %v512 = vld [vmem:[%s500 + $0x2c] sm:$0xf]
    %v513 = vld [vmem:[%s500 + $0x30] sm:$0xf]
    %v514 = vld [vmem:[%s500 + $0x34] sm:$0xf]
    %v515 = vld [vmem:[%s500 + $0x38] sm:$0xf]
    %v516 = vld [vmem:[%s500 + $0x3c] sm:$0xf]
    %s517 = scalar_lea.vmem %s2, 4
    %v518 = vld [vmem:[%s517] sm:$0x1]
    %v520 = vlaneseq
    %v521 = vshrl.u32 %v520, 7
    %v522 = vsub.s32 0, %v521
    %v523 = vrot.slane %v518, %v522
    %v541 = vunpack.c.l.b16 %v501
    %v542 = vunpack.c.l.b16 %v502
    %v543 = vunpack.c.l.b16 %v503
    %v544 = vunpack.c.l.b16 %v504
    %v545 = vunpack.c.l.b16 %v505
    %v546 = vunpack.c.l.b16 %v506
    %v547 = vunpack.c.l.b16 %v507
    %v548 = vunpack.c.l.b16 %v508
    %v549 = vunpack.c.l.b16 %v509
    %v550 = vunpack.c.l.b16 %v510
    %v551 = vunpack.c.l.b16 %v511
    %v552 = vunpack.c.l.b16 %v512
    %v553 = vunpack.c.l.b16 %v513
    %v554 = vunpack.c.l.b16 %v514
    %v555 = vunpack.c.l.b16 %v515
    %v556 = vunpack.c.l.b16 %v516
    %v557 = vpack.c.b16 %v542, %v541
    %v558 = vpack.c.b16 %v544, %v543
    %v559 = vpack.c.b16 %v546, %v545
    %v560 = vpack.c.b16 %v548, %v547
    %v561 = vpack.c.b16 %v550, %v549
    %v562 = vpack.c.b16 %v552, %v551
    %v563 = vpack.c.b16 %v554, %v553
    %v564 = vpack.c.b16 %v556, %v555
    %573 = vmatprep.subr.bf16.mxu0 0
    %574 = vmatpush1.bf16.msra.mxu0 %v557
    %575 = vmatprep.subr.bf16.mxu0 0
    %576 = vmatpush1.bf16.msra.mxu0 %v558
    %577 = vmatprep.subr.bf16.mxu0 0
    %578 = vmatpush1.bf16.msra.mxu0 %v559
    %579 = vmatprep.subr.bf16.mxu0 0
    %580 = vmatpush1.bf16.msra.mxu0 %v560
    %581 = vmatprep.subr.bf16.mxu0 0
    %582 = vmatpush1.bf16.msra.mxu0 %v561
    %583 = vmatprep.subr.bf16.mxu0 0
    %584 = vmatpush1.bf16.msra.mxu0 %v562
    %585 = vmatprep.subr.bf16.mxu0 0
    %586 = vmatpush1.bf16.msra.mxu0 %v563
    %587 = vmatprep.subr.bf16.mxu0 0
    %588 = vmatpush1.bf16.msra.mxu0 %v564
    %589 = vmatprep.subr.bf16.mxu0 0
    %590 = vmatpush1.bf16.msra.mxu0 0
    %591 = vmatprep.subr.bf16.mxu0 0
    %592 = vmatpush1.bf16.msra.mxu0 0
    %593 = vmatprep.subr.bf16.mxu0 0
    %594 = vmatpush1.bf16.msra.mxu0 0
    %595 = vmatprep.subr.bf16.mxu0 0
    %596 = vmatpush1.bf16.msra.mxu0 0
    %597 = vmatprep.subr.bf16.mxu0 0
    %598 = vmatpush1.bf16.msra.mxu0 0
    %599 = vmatprep.subr.bf16.mxu0 0
    %600 = vmatpush1.bf16.msra.mxu0 0
    %601 = vmatprep.subr.bf16.mxu0 0
    %602 = vmatpush1.bf16.msra.mxu0 0
    %603 = vmatprep.subr.bf16.mxu0 0
    %604 = vmatpush1.bf16.msra.mxu0 0
    %605 = vmatprep.mubr.bf16.mxu0 0
    %606 = vmatmul.mubr.bf16.gmra.mrb[0].mxu0 %v499
    %v607 = vpop.f32.mrb[0].mxu0
    %v608 = vadd.f32 %v523, %v607
    %v609 = vpop.f32.mrb[0].mxu0
    %v610 = vpop.f32.mrb[0].mxu0
    %v611 = vadd.f32 %v523, %v610
    %v612 = vpop.f32.mrb[0].mxu0
    %613 = vdwg.mxu0
    %v614 = vpack.c.bf16 %v611, %v608
    %v615 = vtanh.bf16.pop %v614
    %s616 = scalar_lea.vmem [#allocation2], 320
    %v617 = vld [vmem:[%s616] sm:$0xf]
    %v618 = vld [vmem:[%s616 + $0x4] sm:$0xf]
    %v619 = vld [vmem:[%s616 + $0x8] sm:$0xf]
    %v620 = vld [vmem:[%s616 + $0xc] sm:$0xf]
    %v621 = vld [vmem:[%s616 + $0x10] sm:$0xf]
    %v622 = vld [vmem:[%s616 + $0x14] sm:$0xf]
    %v623 = vld [vmem:[%s616 + $0x18] sm:$0xf]
    %v624 = vld [vmem:[%s616 + $0x1c] sm:$0xf]
    %v625 = vld [vmem:[%s616 + $0x20] sm:$0xf]
    %v626 = vld [vmem:[%s616 + $0x24] sm:$0xf]
    %v627 = vld [vmem:[%s616 + $0x28] sm:$0xf]
    %v628 = vld [vmem:[%s616 + $0x2c] sm:$0xf]
    %v629 = vld [vmem:[%s616 + $0x30] sm:$0xf]
    %v630 = vld [vmem:[%s616 + $0x34] sm:$0xf]
    %v631 = vld [vmem:[%s616 + $0x38] sm:$0xf]
    %v632 = vld [vmem:[%s616 + $0x3c] sm:$0xf]
    %s633 = scalar_lea.vmem %s2, 5
    %v634 = vld [vmem:[%s633] sm:$0x1]
    %v636 = vlaneseq
    %v637 = vshrl.u32 %v636, 7
    %v638 = vsub.s32 0, %v637
    %v639 = vrot.slane %v634, %v638
    %v657 = vunpack.c.l.b16 %v617
    %v658 = vunpack.c.l.b16 %v618
    %v659 = vunpack.c.l.b16 %v619
    %v660 = vunpack.c.l.b16 %v620
    %v661 = vunpack.c.l.b16 %v621
    %v662 = vunpack.c.l.b16 %v622
    %v663 = vunpack.c.l.b16 %v623
    %v664 = vunpack.c.l.b16 %v624
    %v665 = vunpack.c.l.b16 %v625
    %v666 = vunpack.c.l.b16 %v626
    %v667 = vunpack.c.l.b16 %v627
    %v668 = vunpack.c.l.b16 %v628
    %v669 = vunpack.c.l.b16 %v629
    %v670 = vunpack.c.l.b16 %v630
    %v671 = vunpack.c.l.b16 %v631
    %v672 = vunpack.c.l.b16 %v632
    %v673 = vpack.c.b16 %v658, %v657
    %v674 = vpack.c.b16 %v660, %v659
    %v675 = vpack.c.b16 %v662, %v661
    %v676 = vpack.c.b16 %v664, %v663
    %v677 = vpack.c.b16 %v666, %v665
    %v678 = vpack.c.b16 %v668, %v667
    %v679 = vpack.c.b16 %v670, %v669
    %v680 = vpack.c.b16 %v672, %v671
    %689 = vmatprep.subr.bf16.mxu0 0
    %690 = vmatpush1.bf16.msra.mxu0 %v673
    %691 = vmatprep.subr.bf16.mxu0 0
    %692 = vmatpush1.bf16.msra.mxu0 %v674
    %693 = vmatprep.subr.bf16.mxu0 0
    %694 = vmatpush1.bf16.msra.mxu0 %v675
    %695 = vmatprep.subr.bf16.mxu0 0
    %696 = vmatpush1.bf16.msra.mxu0 %v676
    %697 = vmatprep.subr.bf16.mxu0 0
    %698 = vmatpush1.bf16.msra.mxu0 %v677
    %699 = vmatprep.subr.bf16.mxu0 0
    %700 = vmatpush1.bf16.msra.mxu0 %v678
    %701 = vmatprep.subr.bf16.mxu0 0
    %702 = vmatpush1.bf16.msra.mxu0 %v679
    %703 = vmatprep.subr.bf16.mxu0 0
    %704 = vmatpush1.bf16.msra.mxu0 %v680
    %705 = vmatprep.subr.bf16.mxu0 0
    %706 = vmatpush1.bf16.msra.mxu0 0
    %707 = vmatprep.subr.bf16.mxu0 0
    %708 = vmatpush1.bf16.msra.mxu0 0
    %709 = vmatprep.subr.bf16.mxu0 0
    %710 = vmatpush1.bf16.msra.mxu0 0
    %711 = vmatprep.subr.bf16.mxu0 0
    %712 = vmatpush1.bf16.msra.mxu0 0
    %713 = vmatprep.subr.bf16.mxu0 0
    %714 = vmatpush1.bf16.msra.mxu0 0
    %715 = vmatprep.subr.bf16.mxu0 0
    %716 = vmatpush1.bf16.msra.mxu0 0
    %717 = vmatprep.subr.bf16.mxu0 0
    %718 = vmatpush1.bf16.msra.mxu0 0
    %719 = vmatprep.subr.bf16.mxu0 0
    %720 = vmatpush1.bf16.msra.mxu0 0
    %721 = vmatprep.mubr.bf16.mxu0 0
    %722 = vmatmul.mubr.bf16.gmra.mrb[0].mxu0 %v615
    %v723 = vpop.f32.mrb[0].mxu0
    %v724 = vadd.f32 %v639, %v723
    %v725 = vpop.f32.mrb[0].mxu0
    %v726 = vpop.f32.mrb[0].mxu0
    %v727 = vadd.f32 %v639, %v726
    %v728 = vpop.f32.mrb[0].mxu0
    %729 = vdwg.mxu0
    %v730 = vtanh.pop %v724
    %v731 = vtanh.pop %v727
    %v732 = vlaneseq
    %v733 = vand.u32 %v732, 127
    %vm734 = vcmp.lt.s32.totalorder %v733, 4
    %v735 = vsel %vm734, %v730, -1e+30
    %v736 = vsel %vm734, %v731, -1e+30
    %737 = vmax.xlane.f32.xlu0 %v735
    %v738 = vpop.xlane.xlu0 %737
    %739 = vmax.xlane.f32.xlu0 %v736
    %v740 = vpop.xlane.xlu0 %739
    %v741 = vsub.f32 %v730, %v738
    %v742 = vsub.f32 %v731, %v740
    %v743 = vmul.f32 %v741, 1.442695
    %v744 = vpow.pop %v743
    %v745 = vmul.f32 %v742, 1.442695
    %v746 = vpow.pop %v745
    %v747 = vsel %vm734, %v744, 0.0
    %v748 = vsel %vm734, %v746, 0.0
    %749 = vadd.xlane.f32.xlu0 %v747
    %v750 = vpop.xlane.xlu0 %749
    %751 = vadd.xlane.f32.xlu0 %v748
    %v752 = vpop.xlane.xlu0 %751
    %v753 = vlog2.pop %v750
    %v754 = vmul.f32 %v753, 0.6931472
    %v755 = vlog2.pop %v752
    %v756 = vmul.f32 %v755, 0.6931472
    %v757 = vsub.f32 %v741, %v754
    %v758 = vsub.f32 %v742, %v756
    %v759 = vsel %vm734, %v757, 0.0
    %v760 = vsel %vm734, %v758, 0.0
    %v761 = vpack.c.bf16 %v731, %v730
    %s762 = scalar_lea.vmem [#allocation2], 384
    %v763 = vld [vmem:[%s762] sm:$0xf]
    %v764 = vld [vmem:[%s762 + $0x4] sm:$0xf]
    %v765 = vld [vmem:[%s762 + $0x8] sm:$0xf]
    %v766 = vld [vmem:[%s762 + $0xc] sm:$0xf]
    %v767 = vld [vmem:[%s762 + $0x10] sm:$0xf]
    %v768 = vld [vmem:[%s762 + $0x14] sm:$0xf]
    %v769 = vld [vmem:[%s762 + $0x18] sm:$0xf]
    %v770 = vld [vmem:[%s762 + $0x1c] sm:$0xf]
    %v771 = vld [vmem:[%s762 + $0x20] sm:$0xf]
    %v772 = vld [vmem:[%s762 + $0x24] sm:$0xf]
    %v773 = vld [vmem:[%s762 + $0x28] sm:$0xf]
    %v774 = vld [vmem:[%s762 + $0x2c] sm:$0xf]
    %v775 = vld [vmem:[%s762 + $0x30] sm:$0xf]
    %v776 = vld [vmem:[%s762 + $0x34] sm:$0xf]
    %v777 = vld [vmem:[%s762 + $0x38] sm:$0xf]
    %v778 = vld [vmem:[%s762 + $0x3c] sm:$0xf]
    %s779 = scalar_lea.vmem %s2, 6
    %v780 = vld [vmem:[%s779] sm:$0x1]
    %v782 = vlaneseq
    %v783 = vshrl.u32 %v782, 7
    %v784 = vsub.s32 0, %v783
    %v785 = vrot.slane %v780, %v784
    %v803 = vunpack.c.l.b16 %v763
    %v804 = vunpack.c.l.b16 %v764
    %v805 = vunpack.c.l.b16 %v765
    %v806 = vunpack.c.l.b16 %v766
    %v807 = vunpack.c.l.b16 %v767
    %v808 = vunpack.c.l.b16 %v768
    %v809 = vunpack.c.l.b16 %v769
    %v810 = vunpack.c.l.b16 %v770
    %v811 = vunpack.c.l.b16 %v771
    %v812 = vunpack.c.l.b16 %v772
    %v813 = vunpack.c.l.b16 %v773
    %v814 = vunpack.c.l.b16 %v774
    %v815 = vunpack.c.l.b16 %v775
    %v816 = vunpack.c.l.b16 %v776
    %v817 = vunpack.c.l.b16 %v777
    %v818 = vunpack.c.l.b16 %v778
    %v819 = vpack.c.b16 %v804, %v803
    %v820 = vpack.c.b16 %v806, %v805
    %v821 = vpack.c.b16 %v808, %v807
    %v822 = vpack.c.b16 %v810, %v809
    %v823 = vpack.c.b16 %v812, %v811
    %v824 = vpack.c.b16 %v814, %v813
    %v825 = vpack.c.b16 %v816, %v815
    %v826 = vpack.c.b16 %v818, %v817
    %835 = vmatprep.subr.bf16.mxu0 0
    %836 = vmatpush1.bf16.msra.mxu0 %v819
    %837 = vmatprep.subr.bf16.mxu0 0
    %838 = vmatpush1.bf16.msra.mxu0 %v820
    %839 = vmatprep.subr.bf16.mxu0 0
    %840 = vmatpush1.bf16.msra.mxu0 %v821
    %841 = vmatprep.subr.bf16.mxu0 0
    %842 = vmatpush1.bf16.msra.mxu0 %v822
    %843 = vmatprep.subr.bf16.mxu0 0
    %844 = vmatpush1.bf16.msra.mxu0 %v823
    %845 = vmatprep.subr.bf16.mxu0 0
    %846 = vmatpush1.bf16.msra.mxu0 %v824
    %847 = vmatprep.subr.bf16.mxu0 0
    %848 = vmatpush1.bf16.msra.mxu0 %v825
    %849 = vmatprep.subr.bf16.mxu0 0
    %850 = vmatpush1.bf16.msra.mxu0 %v826
    %851 = vmatprep.subr.bf16.mxu0 0
    %852 = vmatpush1.bf16.msra.mxu0 0
    %853 = vmatprep.subr.bf16.mxu0 0
    %854 = vmatpush1.bf16.msra.mxu0 0
    %855 = vmatprep.subr.bf16.mxu0 0
    %856 = vmatpush1.bf16.msra.mxu0 0
    %857 = vmatprep.subr.bf16.mxu0 0
    %858 = vmatpush1.bf16.msra.mxu0 0
    %859 = vmatprep.subr.bf16.mxu0 0
    %860 = vmatpush1.bf16.msra.mxu0 0
    %861 = vmatprep.subr.bf16.mxu0 0
    %862 = vmatpush1.bf16.msra.mxu0 0
    %863 = vmatprep.subr.bf16.mxu0 0
    %864 = vmatpush1.bf16.msra.mxu0 0
    %865 = vmatprep.subr.bf16.mxu0 0
    %866 = vmatpush1.bf16.msra.mxu0 0
    %867 = vmatprep.mubr.bf16.mxu0 0
    %868 = vmatmul.mubr.bf16.gmra.mrb[0].mxu0 %v761
    %v869 = vpop.f32.mrb[0].mxu0
    %v870 = vadd.f32 %v785, %v869
    %v871 = vpop.f32.mrb[0].mxu0
    %v872 = vpop.f32.mrb[0].mxu0
    %v873 = vadd.f32 %v785, %v872
    %v874 = vpop.f32.mrb[0].mxu0
    %875 = vdwg.mxu0
    %v876 = vpack.c.bf16 %v873, %v870
    %v877 = vtanh.bf16.pop %v876
    %s878 = scalar_lea.vmem [#allocation2], 448
    %v879 = vld [vmem:[%s878] sm:$0xf]
    %v880 = vld [vmem:[%s878 + $0x4] sm:$0xf]
    %v881 = vld [vmem:[%s878 + $0x8] sm:$0xf]
    %v882 = vld [vmem:[%s878 + $0xc] sm:$0xf]
    %v883 = vld [vmem:[%s878 + $0x10] sm:$0xf]
    %v884 = vld [vmem:[%s878 + $0x14] sm:$0xf]
    %v885 = vld [vmem:[%s878 + $0x18] sm:$0xf]
    %v886 = vld [vmem:[%s878 + $0x1c] sm:$0xf]
    %v887 = vld [vmem:[%s878 + $0x20] sm:$0xf]
    %v888 = vld [vmem:[%s878 + $0x24] sm:$0xf]
    %v889 = vld [vmem:[%s878 + $0x28] sm:$0xf]
    %v890 = vld [vmem:[%s878 + $0x2c] sm:$0xf]
    %v891 = vld [vmem:[%s878 + $0x30] sm:$0xf]
    %v892 = vld [vmem:[%s878 + $0x34] sm:$0xf]
    %v893 = vld [vmem:[%s878 + $0x38] sm:$0xf]
    %v894 = vld [vmem:[%s878 + $0x3c] sm:$0xf]
    %s895 = scalar_lea.vmem %s2, 7
    %v896 = vld [vmem:[%s895] sm:$0x1]
    %v898 = vlaneseq
    %v899 = vshrl.u32 %v898, 7
    %v900 = vsub.s32 0, %v899
    %v901 = vrot.slane %v896, %v900
    %v919 = vunpack.c.l.b16 %v879
    %v920 = vunpack.c.l.b16 %v880
    %v921 = vunpack.c.l.b16 %v881
    %v922 = vunpack.c.l.b16 %v882
    %v923 = vunpack.c.l.b16 %v883
    %v924 = vunpack.c.l.b16 %v884
    %v925 = vunpack.c.l.b16 %v885
    %v926 = vunpack.c.l.b16 %v886
    %v927 = vunpack.c.l.b16 %v887
    %v928 = vunpack.c.l.b16 %v888
    %v929 = vunpack.c.l.b16 %v889
    %v930 = vunpack.c.l.b16 %v890
    %v931 = vunpack.c.l.b16 %v891
    %v932 = vunpack.c.l.b16 %v892
    %v933 = vunpack.c.l.b16 %v893
    %v934 = vunpack.c.l.b16 %v894
    %v935 = vpack.c.b16 %v920, %v919
    %v936 = vpack.c.b16 %v922, %v921
    %v937 = vpack.c.b16 %v924, %v923
    %v938 = vpack.c.b16 %v926, %v925
    %v939 = vpack.c.b16 %v928, %v927
    %v940 = vpack.c.b16 %v930, %v929
    %v941 = vpack.c.b16 %v932, %v931
    %v942 = vpack.c.b16 %v934, %v933
    %951 = vmatprep.subr.bf16.mxu0 0
    %952 = vmatpush1.bf16.msra.mxu0 %v935
    %953 = vmatprep.subr.bf16.mxu0 0
    %954 = vmatpush1.bf16.msra.mxu0 %v936
    %955 = vmatprep.subr.bf16.mxu0 0
    %956 = vmatpush1.bf16.msra.mxu0 %v937
    %957 = vmatprep.subr.bf16.mxu0 0
    %958 = vmatpush1.bf16.msra.mxu0 %v938
    %959 = vmatprep.subr.bf16.mxu0 0
    %960 = vmatpush1.bf16.msra.mxu0 %v939
    %961 = vmatprep.subr.bf16.mxu0 0
    %962 = vmatpush1.bf16.msra.mxu0 %v940
    %963 = vmatprep.subr.bf16.mxu0 0
    %964 = vmatpush1.bf16.msra.mxu0 %v941
    %965 = vmatprep.subr.bf16.mxu0 0
    %966 = vmatpush1.bf16.msra.mxu0 %v942
    %967 = vmatprep.subr.bf16.mxu0 0
    %968 = vmatpush1.bf16.msra.mxu0 0
    %969 = vmatprep.subr.bf16.mxu0 0
    %970 = vmatpush1.bf16.msra.mxu0 0
    %971 = vmatprep.subr.bf16.mxu0 0
    %972 = vmatpush1.bf16.msra.mxu0 0
    %973 = vmatprep.subr.bf16.mxu0 0
    %974 = vmatpush1.bf16.msra.mxu0 0
    %975 = vmatprep.subr.bf16.mxu0 0
    %976 = vmatpush1.bf16.msra.mxu0 0
    %977 = vmatprep.subr.bf16.mxu0 0
    %978 = vmatpush1.bf16.msra.mxu0 0
    %979 = vmatprep.subr.bf16.mxu0 0
    %980 = vmatpush1.bf16.msra.mxu0 0
    %981 = vmatprep.subr.bf16.mxu0 0
    %982 = vmatpush1.bf16.msra.mxu0 0
    %983 = vmatprep.mubr.bf16.mxu0 0
    %984 = vmatmul.mubr.bf16.gmra.mrb[0].mxu0 %v877
    %v985 = vpop.f32.mrb[0].mxu0
    %v986 = vadd.f32 %v901, %v985
    %v987 = vpop.f32.mrb[0].mxu0
    %v988 = vpop.f32.mrb[0].mxu0
    %v989 = vadd.f32 %v901, %v988
    %v990 = vpop.f32.mrb[0].mxu0
    %991 = vdwg.mxu0
    %v992 = vpack.c.bf16 %v989, %v986
    %v993 = vtanh.bf16.pop %v992
    %s994 = scalar_lea.vmem [#allocation2], 512
    %v995 = vld [vmem:[%s994] sm:$0xf]
    %v996 = vld [vmem:[%s994 + $0x4] sm:$0xf]
    %v997 = vld [vmem:[%s994 + $0x8] sm:$0xf]
    %v998 = vld [vmem:[%s994 + $0xc] sm:$0xf]
    %v999 = vld [vmem:[%s994 + $0x10] sm:$0xf]
    %v1000 = vld [vmem:[%s994 + $0x14] sm:$0xf]
    %v1001 = vld [vmem:[%s994 + $0x18] sm:$0xf]
    %v1002 = vld [vmem:[%s994 + $0x1c] sm:$0xf]
    %v1003 = vld [vmem:[%s994 + $0x20] sm:$0xf]
    %v1004 = vld [vmem:[%s994 + $0x24] sm:$0xf]
    %v1005 = vld [vmem:[%s994 + $0x28] sm:$0xf]
    %v1006 = vld [vmem:[%s994 + $0x2c] sm:$0xf]
    %v1007 = vld [vmem:[%s994 + $0x30] sm:$0xf]
    %v1008 = vld [vmem:[%s994 + $0x34] sm:$0xf]
    %v1009 = vld [vmem:[%s994 + $0x38] sm:$0xf]
    %v1010 = vld [vmem:[%s994 + $0x3c] sm:$0xf]
    %s1011 = scalar_lea.vmem %s2, 8
    %v1012 = vld [vmem:[%s1011] sm:$0x1]
    %v1014 = vlaneseq
    %v1015 = vshrl.u32 %v1014, 7
    %v1016 = vsub.s32 0, %v1015
    %v1017 = vrot.slane %v1012, %v1016
    %v1035 = vunpack.c.l.b16 %v995
    %v1036 = vunpack.c.l.b16 %v996
    %v1037 = vunpack.c.l.b16 %v997
    %v1038 = vunpack.c.l.b16 %v998
    %v1039 = vunpack.c.l.b16 %v999
    %v1040 = vunpack.c.l.b16 %v1000
    %v1041 = vunpack.c.l.b16 %v1001
    %v1042 = vunpack.c.l.b16 %v1002
    %v1043 = vunpack.c.l.b16 %v1003
    %v1044 = vunpack.c.l.b16 %v1004
    %v1045 = vunpack.c.l.b16 %v1005
    %v1046 = vunpack.c.l.b16 %v1006
    %v1047 = vunpack.c.l.b16 %v1007
    %v1048 = vunpack.c.l.b16 %v1008
    %v1049 = vunpack.c.l.b16 %v1009
    %v1050 = vunpack.c.l.b16 %v1010
    %v1051 = vpack.c.b16 %v1036, %v1035
    %v1052 = vpack.c.b16 %v1038, %v1037
    %v1053 = vpack.c.b16 %v1040, %v1039
    %v1054 = vpack.c.b16 %v1042, %v1041
    %v1055 = vpack.c.b16 %v1044, %v1043
    %v1056 = vpack.c.b16 %v1046, %v1045
    %v1057 = vpack.c.b16 %v1048, %v1047
    %v1058 = vpack.c.b16 %v1050, %v1049
    %1067 = vmatprep.subr.bf16.mxu0 0
    %1068 = vmatpush1.bf16.msra.mxu0 %v1051
    %1069 = vmatprep.subr.bf16.mxu0 0
    %1070 = vmatpush1.bf16.msra.mxu0 %v1052
    %1071 = vmatprep.subr.bf16.mxu0 0
    %1072 = vmatpush1.bf16.msra.mxu0 %v1053
    %1073 = vmatprep.subr.bf16.mxu0 0
    %1074 = vmatpush1.bf16.msra.mxu0 %v1054
    %1075 = vmatprep.subr.bf16.mxu0 0
    %1076 = vmatpush1.bf16.msra.mxu0 %v1055
    %1077 = vmatprep.subr.bf16.mxu0 0
    %1078 = vmatpush1.bf16.msra.mxu0 %v1056
    %1079 = vmatprep.subr.bf16.mxu0 0
    %1080 = vmatpush1.bf16.msra.mxu0 %v1057
    %1081 = vmatprep.subr.bf16.mxu0 0
    %1082 = vmatpush1.bf16.msra.mxu0 %v1058
    %1083 = vmatprep.subr.bf16.mxu0 0
    %1084 = vmatpush1.bf16.msra.mxu0 0
    %1085 = vmatprep.subr.bf16.mxu0 0
    %1086 = vmatpush1.bf16.msra.mxu0 0
    %1087 = vmatprep.subr.bf16.mxu0 0
    %1088 = vmatpush1.bf16.msra.mxu0 0
    %1089 = vmatprep.subr.bf16.mxu0 0
    %1090 = vmatpush1.bf16.msra.mxu0 0
    %1091 = vmatprep.subr.bf16.mxu0 0
    %1092 = vmatpush1.bf16.msra.mxu0 0
    %1093 = vmatprep.subr.bf16.mxu0 0
    %1094 = vmatpush1.bf16.msra.mxu0 0
    %1095 = vmatprep.subr.bf16.mxu0 0
    %1096 = vmatpush1.bf16.msra.mxu0 0
    %1097 = vmatprep.subr.bf16.mxu0 0
    %1098 = vmatpush1.bf16.msra.mxu0 0
    %1099 = vmatprep.mubr.bf16.mxu0 0
    %1100 = vmatmul.mubr.bf16.gmra.mrb[0].mxu0 %v993
    %v1101 = vpop.f32.mrb[0].mxu0
    %v1102 = vadd.f32 %v1017, %v1101
    %v1103 = vpop.f32.mrb[0].mxu0
    %v1104 = vpop.f32.mrb[0].mxu0
    %v1105 = vadd.f32 %v1017, %v1104
    %v1106 = vpop.f32.mrb[0].mxu0
    %1107 = vdwg.mxu0
    %v1108 = vpack.c.bf16 %v1105, %v1102
    %v1109 = vtanh.bf16.pop %v1108
    %s1110 = scalar_lea.vmem [#allocation2], 576
    %v1111 = vld [vmem:[%s1110] sm:$0xf]
    %v1112 = vld [vmem:[%s1110 + $0x4] sm:$0xf]
    %v1113 = vld [vmem:[%s1110 + $0x8] sm:$0xf]
    %v1114 = vld [vmem:[%s1110 + $0xc] sm:$0xf]
    %v1115 = vld [vmem:[%s1110 + $0x10] sm:$0xf]
    %v1116 = vld [vmem:[%s1110 + $0x14] sm:$0xf]
    %v1117 = vld [vmem:[%s1110 + $0x18] sm:$0xf]
    %v1118 = vld [vmem:[%s1110 + $0x1c] sm:$0xf]
    %v1119 = vld [vmem:[%s1110 + $0x20] sm:$0xf]
    %v1120 = vld [vmem:[%s1110 + $0x24] sm:$0xf]
    %v1121 = vld [vmem:[%s1110 + $0x28] sm:$0xf]
    %v1122 = vld [vmem:[%s1110 + $0x2c] sm:$0xf]
    %v1123 = vld [vmem:[%s1110 + $0x30] sm:$0xf]
    %v1124 = vld [vmem:[%s1110 + $0x34] sm:$0xf]
    %v1125 = vld [vmem:[%s1110 + $0x38] sm:$0xf]
    %v1126 = vld [vmem:[%s1110 + $0x3c] sm:$0xf]
    %s1127 = scalar_lea.vmem %s2, 9
    %v1128 = vld [vmem:[%s1127] sm:$0x1]
    %v1130 = vlaneseq
    %v1131 = vshrl.u32 %v1130, 7
    %v1132 = vsub.s32 0, %v1131
    %v1133 = vrot.slane %v1128, %v1132
    %v1151 = vunpack.c.l.b16 %v1111
    %v1152 = vunpack.c.l.b16 %v1112
    %v1153 = vunpack.c.l.b16 %v1113
    %v1154 = vunpack.c.l.b16 %v1114
    %v1155 = vunpack.c.l.b16 %v1115
    %v1156 = vunpack.c.l.b16 %v1116
    %v1157 = vunpack.c.l.b16 %v1117
    %v1158 = vunpack.c.l.b16 %v1118
    %v1159 = vunpack.c.l.b16 %v1119
    %v1160 = vunpack.c.l.b16 %v1120
    %v1161 = vunpack.c.l.b16 %v1121
    %v1162 = vunpack.c.l.b16 %v1122
    %v1163 = vunpack.c.l.b16 %v1123
    %v1164 = vunpack.c.l.b16 %v1124
    %v1165 = vunpack.c.l.b16 %v1125
    %v1166 = vunpack.c.l.b16 %v1126
    %v1167 = vpack.c.b16 %v1152, %v1151
    %v1168 = vpack.c.b16 %v1154, %v1153
    %v1169 = vpack.c.b16 %v1156, %v1155
    %v1170 = vpack.c.b16 %v1158, %v1157
    %v1171 = vpack.c.b16 %v1160, %v1159
    %v1172 = vpack.c.b16 %v1162, %v1161
    %v1173 = vpack.c.b16 %v1164, %v1163
    %v1174 = vpack.c.b16 %v1166, %v1165
    %1183 = vmatprep.subr.bf16.mxu0 0
    %1184 = vmatpush1.bf16.msra.mxu0 %v1167
    %1185 = vmatprep.subr.bf16.mxu0 0
    %1186 = vmatpush1.bf16.msra.mxu0 %v1168
    %1187 = vmatprep.subr.bf16.mxu0 0
    %1188 = vmatpush1.bf16.msra.mxu0 %v1169
    %1189 = vmatprep.subr.bf16.mxu0 0
    %1190 = vmatpush1.bf16.msra.mxu0 %v1170
    %1191 = vmatprep.subr.bf16.mxu0 0
    %1192 = vmatpush1.bf16.msra.mxu0 %v1171
    %1193 = vmatprep.subr.bf16.mxu0 0
    %1194 = vmatpush1.bf16.msra.mxu0 %v1172
    %1195 = vmatprep.subr.bf16.mxu0 0
    %1196 = vmatpush1.bf16.msra.mxu0 %v1173
    %1197 = vmatprep.subr.bf16.mxu0 0
    %1198 = vmatpush1.bf16.msra.mxu0 %v1174
    %1199 = vmatprep.subr.bf16.mxu0 0
    %1200 = vmatpush1.bf16.msra.mxu0 0
    %1201 = vmatprep.subr.bf16.mxu0 0
    %1202 = vmatpush1.bf16.msra.mxu0 0
    %1203 = vmatprep.subr.bf16.mxu0 0
    %1204 = vmatpush1.bf16.msra.mxu0 0
    %1205 = vmatprep.subr.bf16.mxu0 0
    %1206 = vmatpush1.bf16.msra.mxu0 0
    %1207 = vmatprep.subr.bf16.mxu0 0
    %1208 = vmatpush1.bf16.msra.mxu0 0
    %1209 = vmatprep.subr.bf16.mxu0 0
    %1210 = vmatpush1.bf16.msra.mxu0 0
    %1211 = vmatprep.subr.bf16.mxu0 0
    %1212 = vmatpush1.bf16.msra.mxu0 0
    %1213 = vmatprep.subr.bf16.mxu0 0
    %1214 = vmatpush1.bf16.msra.mxu0 0
    %1215 = vmatprep.mubr.bf16.mxu0 0
    %1216 = vmatmul.mubr.bf16.gmra.mrb[0].mxu0 %v1109
    %v1217 = vpop.f32.mrb[0].mxu0
    %v1218 = vadd.f32 %v1133, %v1217
    %v1219 = vpop.f32.mrb[0].mxu0
    %v1220 = vpop.f32.mrb[0].mxu0
    %v1221 = vadd.f32 %v1133, %v1220
    %v1222 = vpop.f32.mrb[0].mxu0
    %1223 = vdwg.mxu0
    %v1224 = vpack.c.bf16 %v1221, %v1218
    %v1225 = vtanh.bf16.pop %v1224
    %s1226 = scalar_lea.vmem [#allocation2], 640
    %v1227 = vld [vmem:[%s1226] sm:$0xf]
    %v1228 = vld [vmem:[%s1226 + $0x4] sm:$0xf]
    %v1229 = vld [vmem:[%s1226 + $0x8] sm:$0xf]
    %v1230 = vld [vmem:[%s1226 + $0xc] sm:$0xf]
    %v1231 = vld [vmem:[%s1226 + $0x10] sm:$0xf]
    %v1232 = vld [vmem:[%s1226 + $0x14] sm:$0xf]
    %v1233 = vld [vmem:[%s1226 + $0x18] sm:$0xf]
    %v1234 = vld [vmem:[%s1226 + $0x1c] sm:$0xf]
    %v1235 = vld [vmem:[%s1226 + $0x20] sm:$0xf]
    %v1236 = vld [vmem:[%s1226 + $0x24] sm:$0xf]
    %v1237 = vld [vmem:[%s1226 + $0x28] sm:$0xf]
    %v1238 = vld [vmem:[%s1226 + $0x2c] sm:$0xf]
    %v1239 = vld [vmem:[%s1226 + $0x30] sm:$0xf]
    %v1240 = vld [vmem:[%s1226 + $0x34] sm:$0xf]
    %v1241 = vld [vmem:[%s1226 + $0x38] sm:$0xf]
    %v1242 = vld [vmem:[%s1226 + $0x3c] sm:$0xf]
    %s1243 = scalar_lea.vmem %s2, 10
    %v1244 = vld [vmem:[%s1243] sm:$0x1]
    %v1246 = vlaneseq
    %v1247 = vshrl.u32 %v1246, 7
    %v1248 = vsub.s32 0, %v1247
    %v1249 = vrot.slane %v1244, %v1248
    %v1267 = vunpack.c.l.b16 %v1227
    %v1268 = vunpack.c.l.b16 %v1228
    %v1269 = vunpack.c.l.b16 %v1229
    %v1270 = vunpack.c.l.b16 %v1230
    %v1271 = vunpack.c.l.b16 %v1231
    %v1272 = vunpack.c.l.b16 %v1232
    %v1273 = vunpack.c.l.b16 %v1233
    %v1274 = vunpack.c.l.b16 %v1234
    %v1275 = vunpack.c.l.b16 %v1235
    %v1276 = vunpack.c.l.b16 %v1236
    %v1277 = vunpack.c.l.b16 %v1237
    %v1278 = vunpack.c.l.b16 %v1238
    %v1279 = vunpack.c.l.b16 %v1239
    %v1280 = vunpack.c.l.b16 %v1240
    %v1281 = vunpack.c.l.b16 %v1241
    %v1282 = vunpack.c.l.b16 %v1242
    %v1283 = vpack.c.b16 %v1268, %v1267
    %v1284 = vpack.c.b16 %v1270, %v1269
    %v1285 = vpack.c.b16 %v1272, %v1271
    %v1286 = vpack.c.b16 %v1274, %v1273
    %v1287 = vpack.c.b16 %v1276, %v1275
    %v1288 = vpack.c.b16 %v1278, %v1277
    %v1289 = vpack.c.b16 %v1280, %v1279
    %v1290 = vpack.c.b16 %v1282, %v1281
    %1299 = vmatprep.subr.bf16.mxu0 0
    %1300 = vmatpush1.bf16.msra.mxu0 %v1283
    %1301 = vmatprep.subr.bf16.mxu0 0
    %1302 = vmatpush1.bf16.msra.mxu0 %v1284
    %1303 = vmatprep.subr.bf16.mxu0 0
    %1304 = vmatpush1.bf16.msra.mxu0 %v1285
    %1305 = vmatprep.subr.bf16.mxu0 0
    %1306 = vmatpush1.bf16.msra.mxu0 %v1286
    %1307 = vmatprep.subr.bf16.mxu0 0
    %1308 = vmatpush1.bf16.msra.mxu0 %v1287
    %1309 = vmatprep.subr.bf16.mxu0 0
    %1310 = vmatpush1.bf16.msra.mxu0 %v1288
    %1311 = vmatprep.subr.bf16.mxu0 0
    %1312 = vmatpush1.bf16.msra.mxu0 %v1289
    %1313 = vmatprep.subr.bf16.mxu0 0
    %1314 = vmatpush1.bf16.msra.mxu0 %v1290
    %1315 = vmatprep.subr.bf16.mxu0 0
    %1316 = vmatpush1.bf16.msra.mxu0 0
    %1317 = vmatprep.subr.bf16.mxu0 0
    %1318 = vmatpush1.bf16.msra.mxu0 0
    %1319 = vmatprep.subr.bf16.mxu0 0
    %1320 = vmatpush1.bf16.msra.mxu0 0
    %1321 = vmatprep.subr.bf16.mxu0 0
    %1322 = vmatpush1.bf16.msra.mxu0 0
    %1323 = vmatprep.subr.bf16.mxu0 0
    %1324 = vmatpush1.bf16.msra.mxu0 0
    %1325 = vmatprep.subr.bf16.mxu0 0
    %1326 = vmatpush1.bf16.msra.mxu0 0
    %1327 = vmatprep.subr.bf16.mxu0 0
    %1328 = vmatpush1.bf16.msra.mxu0 0
    %1329 = vmatprep.subr.bf16.mxu0 0
    %1330 = vmatpush1.bf16.msra.mxu0 0
    %1331 = vmatprep.mubr.bf16.mxu0 0
    %1332 = vmatmul.mubr.bf16.gmra.mrb[0].mxu0 %v1225
    %v1333 = vpop.f32.mrb[0].mxu0
    %v1334 = vadd.f32 %v1249, %v1333
    %v1335 = vpop.f32.mrb[0].mxu0
    %v1336 = vpop.f32.mrb[0].mxu0
    %v1337 = vadd.f32 %v1249, %v1336
    %v1338 = vpop.f32.mrb[0].mxu0
    %1339 = vdwg.mxu0
    %v1340 = vpack.c.bf16 %v1337, %v1334
    %v1341 = vtanh.bf16.pop %v1340
    %s1342 = scalar_lea.vmem [#allocation2], 704
    %v1343 = vld [vmem:[%s1342] sm:$0xf]
    %v1344 = vld [vmem:[%s1342 + $0x4] sm:$0xf]
    %v1345 = vld [vmem:[%s1342 + $0x8] sm:$0xf]
    %v1346 = vld [vmem:[%s1342 + $0xc] sm:$0xf]
    %v1347 = vld [vmem:[%s1342 + $0x10] sm:$0xf]
    %v1348 = vld [vmem:[%s1342 + $0x14] sm:$0xf]
    %v1349 = vld [vmem:[%s1342 + $0x18] sm:$0xf]
    %v1350 = vld [vmem:[%s1342 + $0x1c] sm:$0xf]
    %v1351 = vld [vmem:[%s1342 + $0x20] sm:$0xf]
    %v1352 = vld [vmem:[%s1342 + $0x24] sm:$0xf]
    %v1353 = vld [vmem:[%s1342 + $0x28] sm:$0xf]
    %v1354 = vld [vmem:[%s1342 + $0x2c] sm:$0xf]
    %v1355 = vld [vmem:[%s1342 + $0x30] sm:$0xf]
    %v1356 = vld [vmem:[%s1342 + $0x34] sm:$0xf]
    %v1357 = vld [vmem:[%s1342 + $0x38] sm:$0xf]
    %v1358 = vld [vmem:[%s1342 + $0x3c] sm:$0xf]
    %s1359 = scalar_lea.vmem %s2, 11
    %v1360 = vld [vmem:[%s1359] sm:$0x1]
    %v1362 = vlaneseq
    %v1363 = vshrl.u32 %v1362, 7
    %v1364 = vsub.s32 0, %v1363
    %v1365 = vrot.slane %v1360, %v1364
    %v1383 = vunpack.c.l.b16 %v1343
    %v1384 = vunpack.c.l.b16 %v1344
    %v1385 = vunpack.c.l.b16 %v1345
    %v1386 = vunpack.c.l.b16 %v1346
    %v1387 = vunpack.c.l.b16 %v1347
    %v1388 = vunpack.c.l.b16 %v1348
    %v1389 = vunpack.c.l.b16 %v1349
    %v1390 = vunpack.c.l.b16 %v1350
    %v1391 = vunpack.c.l.b16 %v1351
    %v1392 = vunpack.c.l.b16 %v1352
    %v1393 = vunpack.c.l.b16 %v1353
    %v1394 = vunpack.c.l.b16 %v1354
    %v1395 = vunpack.c.l.b16 %v1355
    %v1396 = vunpack.c.l.b16 %v1356
    %v1397 = vunpack.c.l.b16 %v1357
    %v1398 = vunpack.c.l.b16 %v1358
    %v1399 = vpack.c.b16 %v1384, %v1383
    %v1400 = vpack.c.b16 %v1386, %v1385
    %v1401 = vpack.c.b16 %v1388, %v1387
    %v1402 = vpack.c.b16 %v1390, %v1389
    %v1403 = vpack.c.b16 %v1392, %v1391
    %v1404 = vpack.c.b16 %v1394, %v1393
    %v1405 = vpack.c.b16 %v1396, %v1395
    %v1406 = vpack.c.b16 %v1398, %v1397
    %1415 = vmatprep.subr.bf16.mxu0 0
    %1416 = vmatpush1.bf16.msra.mxu0 %v1399
    %1417 = vmatprep.subr.bf16.mxu0 0
    %1418 = vmatpush1.bf16.msra.mxu0 %v1400
    %1419 = vmatprep.subr.bf16.mxu0 0
    %1420 = vmatpush1.bf16.msra.mxu0 %v1401
    %1421 = vmatprep.subr.bf16.mxu0 0
    %1422 = vmatpush1.bf16.msra.mxu0 %v1402
    %1423 = vmatprep.subr.bf16.mxu0 0
    %1424 = vmatpush1.bf16.msra.mxu0 %v1403
    %1425 = vmatprep.subr.bf16.mxu0 0
    %1426 = vmatpush1.bf16.msra.mxu0 %v1404
    %1427 = vmatprep.subr.bf16.mxu0 0
    %1428 = vmatpush1.bf16.msra.mxu0 %v1405
    %1429 = vmatprep.subr.bf16.mxu0 0
    %1430 = vmatpush1.bf16.msra.mxu0 %v1406
    %1431 = vmatprep.subr.bf16.mxu0 0
    %1432 = vmatpush1.bf16.msra.mxu0 0
    %1433 = vmatprep.subr.bf16.mxu0 0
    %1434 = vmatpush1.bf16.msra.mxu0 0
    %1435 = vmatprep.subr.bf16.mxu0 0
    %1436 = vmatpush1.bf16.msra.mxu0 0
    %1437 = vmatprep.subr.bf16.mxu0 0
    %1438 = vmatpush1.bf16.msra.mxu0 0
    %1439 = vmatprep.subr.bf16.mxu0 0
    %1440 = vmatpush1.bf16.msra.mxu0 0
    %1441 = vmatprep.subr.bf16.mxu0 0
    %1442 = vmatpush1.bf16.msra.mxu0 0
    %1443 = vmatprep.subr.bf16.mxu0 0
    %1444 = vmatpush1.bf16.msra.mxu0 0
    %1445 = vmatprep.subr.bf16.mxu0 0
    %1446 = vmatpush1.bf16.msra.mxu0 0
    %1447 = vmatprep.mubr.bf16.mxu0 0
    %1448 = vmatmul.mubr.bf16.gmra.mrb[0].mxu0 %v1341
    %v1449 = vpop.f32.mrb[0].mxu0
    %v1450 = vadd.f32 %v1365, %v1449
    %v1451 = vpop.f32.mrb[0].mxu0
    %v1452 = vpop.f32.mrb[0].mxu0
    %v1453 = vadd.f32 %v1365, %v1452
    %v1454 = vpop.f32.mrb[0].mxu0
    %1455 = vdwg.mxu0
    %v1456 = vtanh.pop %v1450
    %v1457 = vtanh.pop %v1453
    %1458 = vst [vmem:[%s3] sm:$0xff] %v265
    %1459 = vst [vmem:[%s3 + $0x8] sm:$0xff] %v266
    %s1460 = scalar_lea.vmem %s3, 16
    %1461 = vst [vmem:[%s1460] sm:$0xff] %v730
    %1462 = vst [vmem:[%s1460 + $0x8] sm:$0xff] %v731
    %s1463 = scalar_lea.vmem %s3, 32
    %1464 = vst [vmem:[%s1463] sm:$0xff] %v1456
    %1465 = vst [vmem:[%s1463 + $0x8] sm:$0xff] %v1457
    %s1466 = scalar_lea.vmem %s3, 48
    %1467 = vst [vmem:[%s1466] sm:$0xff] %v759
    %1468 = vst [vmem:[%s1466 + $0x8] sm:$0xff] %v760
    // Predicated region
    $region18: #{rae_forward.1} parent=1 // pred_check
      _
    $region19: #{rae_forward.1} parent=1 // pred_check_branch
      %1470 = sbr.rel (0) target = $region21
    $region20: #{rae_forward.1} parent=1 // pred_region
      _
    $region21: #{rae_forward.1} parent=1 // pred_fallthru
      _
    // Predicated region
    $region22: #{rae_forward.1} parent=1 // pred_check
      _
    $region23: #{rae_forward.1} parent=1 // pred_check_branch
      %1472 = sbr.rel (0) target = $region25
    $region24: #{rae_forward.1} parent=1 // pred_region
      _
    $region25: #{rae_forward.1} parent=1 // pred_fallthru
      _
    %1473 = vsyncpa [#allocation3], 1

</llo_original>
